<compile_context>
chip_gen: v7x
topology: tpu7x:2x2x1
jax: 0.10.0
libtpu: 0.0.40
codegen_flags: <defaults>
</compile_context>

<pallas_src>
import jax
import jax.numpy as jnp
from jax.experimental import pallas as pl
from jax.experimental.pallas import tpu as pltpu

N_EMBD = 32
HIDDEN_DIM = 128
N_HEAD = 1
HEAD_SIZE = N_EMBD // N_HEAD
LN_EPS = 1e-5


def _layernorm(x, gamma, beta):
    # x: (rows, C); gamma/beta: (1, C).  Two-pass form for parity with torch.
    mean = jnp.mean(x, axis=-1, keepdims=True)
    var = jnp.mean((x - mean) ** 2, axis=-1, keepdims=True)
    inv = jax.lax.rsqrt(var + LN_EPS)
    return (x - mean) * inv * gamma + beta


def block_kernel(
    x_ref,        # (N, C)      flattened tokens, N = bb*T
    mask_ref,     # (N, N)      additive bias: 0 allowed / -1e30 masked
    wqkv_ref,     # (C, 3*Hd)   fused q|k|v weights, stored (in, out)
    wproj_ref,    # (Hd, C)
    w1_ref,       # (C, H)
    b1_ref,       # (1, H)
    w2_ref,       # (H, C)
    cvec_ref,     # (6, C)      rows: [bproj, b2, ln1_g, ln1_b, ln2_g, ln2_b]
    o_ref,        # (N, C)
):
    xf = x_ref[...]                                                   # (N, C)

    # ---- fused QKV projection: one 96-wide MXU push ----
    qkv = jnp.dot(xf, wqkv_ref[...], preferred_element_type=jnp.float32)
    q = qkv[:, 0:HEAD_SIZE]
    k = qkv[:, HEAD_SIZE:2 * HEAD_SIZE]
    v = qkv[:, 2 * HEAD_SIZE:3 * HEAD_SIZE]

    # ---- flattened causal attention: whole-token-matrix matmuls ----
    # scores: (N, Hd) x (N, Hd)^T -> (N, N), contraction on dim 1 of both
    wei = jax.lax.dot_general(
        q, k, dimension_numbers=(((1,), (1,)), ((), ())),
        preferred_element_type=jnp.float32)
    wei = wei * (1.0 / (HEAD_SIZE ** 0.5)) + mask_ref[...]            # (N, N)

    # row-wise softmax (max-subtracted; exact divide)
    wei = wei - jnp.max(wei, axis=-1, keepdims=True)
    p = jnp.exp(wei)
    p = p / jnp.sum(p, axis=-1, keepdims=True)

    att = jnp.dot(p, v, preferred_element_type=jnp.float32)           # (N, Hd)

    # ---- per-channel params (one packed tile) ----
    cvec = cvec_ref[...]
    bproj = cvec[0:1, :]
    b2 = cvec[1:2, :]
    g1 = cvec[2:3, :]
    be1 = cvec[3:4, :]
    g2 = cvec[4:5, :]
    be2 = cvec[5:6, :]

    # output projection (dropout = identity in eval mode)
    y = jnp.dot(att, wproj_ref[...], preferred_element_type=jnp.float32) + bproj

    # ---- residual + LayerNorm 1 ----
    x1 = _layernorm(xf + y, g1, be1)                                  # (N, C)

    # ---- feed-forward: Linear -> ReLU -> Linear (dropout = identity) ----
    h = jnp.dot(x1, w1_ref[...], preferred_element_type=jnp.float32) + b1_ref[...]
    h = jnp.maximum(h, 0.0)
    y2 = jnp.dot(h, w2_ref[...], preferred_element_type=jnp.float32) + b2

    # ---- residual + LayerNorm 2 ----
    o_ref[...] = _layernorm(x1 + y2, g2, be2).astype(o_ref.dtype)


def _tensorcores_per_chip():
    """Best-effort detection of multi-TensorCore chips (v7x, v4/v5p megacore)."""
    try:
        kind = jax.devices()[0].device_kind.lower()
    except Exception:
        return 1
    if ("v7" in kind) or ("v4" in kind) or ("v5p" in kind):
        return 2
    return 1


def transformer_block(x, params, *, bb=None):
    """x: (B, T, C) float32.  params: dict of pre-transposed weights."""
    B, T, C = x.shape
    assert C == N_EMBD

    # Split the batch across grid steps only when there is >1 TensorCore to
    # shard onto; otherwise a serial grid loop just costs per-step overhead
    # and halves matmul row occupancy.
    if bb is None:
        if _tensorcores_per_chip() >= 2 and B % 2 == 0 and B >= 2:
            bb = B // 2
        else:
            bb = B
    assert B % bb == 0, "batch must be divisible by the block batch size"
    n_blocks = B // bb
    N = bb * T  # tokens per grid step

    # x / out pre-flattened to (B*T, C): leading-dim merge, free in HBM.
    xf = x.reshape(B * T, C)

    # Fuse q/k/v weights into a single (C, 3*Hd) matrix (outside kernel).
    wqkv = jnp.concatenate([params["wq"], params["wk"], params["wv"]], axis=1)

    # Pack the six tiny per-channel vectors into one (6, C) tile.
    cvec = jnp.concatenate(
        [params["bproj"], params["b2"],
         params["ln1_g"], params["ln1_b"],
         params["ln2_g"], params["ln2_b"]], axis=0)                   # (6, C)

    # Precomputed additive bias in flattened token space:
    # allowed iff same batch row AND causal (key pos <= query pos).
    idx = jnp.arange(N)
    same_batch = (idx[:, None] // T) == (idx[None, :] // T)
    causal = (idx[None, :] % T) <= (idx[:, None] % T)
    mask_bias = jnp.where(same_batch & causal, 0.0, -1e30).astype(jnp.float32)

    def full2(shape):
        return pl.BlockSpec(shape, lambda i: (0, 0))

    in_specs = [
        pl.BlockSpec((N, C), lambda i: (i, 0)),   # x (flattened)
        full2((N, N)),                            # attention bias (constant)
        full2((C, 3 * HEAD_SIZE)),                # wqkv
        full2((HEAD_SIZE * N_HEAD, C)),           # wproj
        full2((C, HIDDEN_DIM)),                   # w1
        full2((1, HIDDEN_DIM)),                   # b1
        full2((HIDDEN_DIM, C)),                   # w2
        full2((6, C)),                            # packed per-channel params
    ]
    out_spec = pl.BlockSpec((N, C), lambda i: (i, 0))

    # Advisory cost estimate so XLA schedules around the tiny custom call.
    tokens = B * T
    flops = (
        2 * tokens * C * (3 * HEAD_SIZE)              # qkv
        + 2 * n_blocks * N * N * HEAD_SIZE * 2        # scores + att@v
        + 2 * tokens * HEAD_SIZE * C                  # out proj
        + 2 * tokens * C * HIDDEN_DIM * 2             # ffn
    )
    bytes_accessed = 4 * (
        2 * tokens * C + N * N + C * 3 * HEAD_SIZE + HEAD_SIZE * C
        + C * HIDDEN_DIM + HIDDEN_DIM + HIDDEN_DIM * C + 6 * C
    )
    cost = pl.CostEstimate(
        flops=flops,
        transcendentals=n_blocks * N * N + 2 * tokens,
        bytes_accessed=bytes_accessed,
    )

    fn = pl.pallas_call(
        block_kernel,
        out_shape=jax.ShapeDtypeStruct((B * T, C), x.dtype),
        grid_spec=pltpu.PrefetchScalarGridSpec(
            num_scalar_prefetch=0,
            grid=(n_blocks,),
            in_specs=in_specs,
            out_specs=out_spec,
        ),
        compiler_params=pltpu.CompilerParams(
            dimension_semantics=("parallel",) if n_blocks > 1 else ("arbitrary",),
        ),
        cost_estimate=cost,
    )

    out = fn(
        xf, mask_bias, wqkv,
        params["wproj"],
        params["w1"], params["b1"],
        params["w2"],
        cvec,
    )
    return out.reshape(B, T, C)


def init_params(key):
    ks = jax.random.split(key, 8)
    scale = 0.02
    return {
        # attention head weights, stored (in, out)
        "wq": scale * jax.random.normal(ks[0], (N_EMBD, HEAD_SIZE), jnp.float32),
        "wk": scale * jax.random.normal(ks[1], (N_EMBD, HEAD_SIZE), jnp.float32),
        "wv": scale * jax.random.normal(ks[2], (N_EMBD, HEAD_SIZE), jnp.float32),
        "wproj": scale * jax.random.normal(ks[3], (HEAD_SIZE * N_HEAD, N_EMBD), jnp.float32),
        "bproj": scale * jax.random.normal(ks[4], (1, N_EMBD), jnp.float32),
        # feed-forward, stored (in, out)
        "w1": scale * jax.random.normal(ks[5], (N_EMBD, HIDDEN_DIM), jnp.float32),
        "b1": scale * jax.random.normal(ks[6], (1, HIDDEN_DIM), jnp.float32),
        "w2": scale * jax.random.normal(ks[7], (HIDDEN_DIM, N_EMBD), jnp.float32),
        "b2": jnp.zeros((1, N_EMBD), jnp.float32),
        # layernorm params (PyTorch init: gamma=1, beta=0)
        "ln1_g": jnp.ones((1, N_EMBD), jnp.float32),
        "ln1_b": jnp.zeros((1, N_EMBD), jnp.float32),
        "ln2_g": jnp.ones((1, N_EMBD), jnp.float32),
        "ln2_b": jnp.zeros((1, N_EMBD), jnp.float32),
    }


def reference_block(x, p):
    """Pure-JAX reference of the PyTorch Block.forward (eval mode)."""
    def ln(v, g, b):
        m = jnp.mean(v, axis=-1, keepdims=True)
        var = jnp.mean((v - m) ** 2, axis=-1, keepdims=True)
        return (v - m) / jnp.sqrt(var + LN_EPS) * g + b

    q = x @ p["wq"]; k = x @ p["wk"]; v = x @ p["wv"]
    wei = jnp.einsum("btd,bsd->bts", q, k) / (HEAD_SIZE ** 0.5)
    T = x.shape[1]
    mask = jnp.tril(jnp.ones((T, T)))
    wei = jnp.where(mask == 0, -jnp.inf, wei)
    wei = jax.nn.softmax(wei, axis=-1)
    att = jnp.einsum("bts,bsd->btd", wei, v)
    y = att @ p["wproj"] + p["bproj"][0]
    x1 = ln(x + y, p["ln1_g"][0], p["ln1_b"][0])
    h = jax.nn.relu(x1 @ p["w1"] + p["b1"][0])
    y2 = h @ p["w2"] + p["b2"][0]
    return ln(x1 + y2, p["ln2_g"][0], p["ln2_b"][0])


if __name__ == "__main__":
    key = jax.random.PRNGKey(0)
    k_x, k_p = jax.random.split(key)

    B, T = 8, 8   # T <= block_size (32)
    x = jax.random.normal(k_x, (B, T, N_EMBD), jnp.float32)
    params = init_params(k_p)

    out = transformer_block(x, params)
    out = jax.block_until_ready(out)

    ref = reference_block(x, params)
    assert out.shape == (B, T, N_EMBD)
    assert jnp.allclose(out, ref, atol=1e-4, rtol=1e-4), "mismatch vs reference"

    print("KERNEL_OK")
</pallas_src>

<mosaic_0001>
module attributes {stable_mosaic.version = 11 : i64} {
  func.func @block_kernel(%arg0: i32, %arg1: memref<64x32xf32, #tpu.memory_space<vmem>>, %arg2: memref<64x64xf32, #tpu.memory_space<vmem>>, %arg3: memref<32x96xf32, #tpu.memory_space<vmem>>, %arg4: memref<32x32xf32, #tpu.memory_space<vmem>>, %arg5: memref<32x128xf32, #tpu.memory_space<vmem>>, %arg6: memref<1x128xf32, #tpu.memory_space<vmem>>, %arg7: memref<128x32xf32, #tpu.memory_space<vmem>>, %arg8: memref<6x32xf32, #tpu.memory_space<vmem>>, %arg9: memref<64x32xf32, #tpu.memory_space<vmem>>) attributes {dimension_semantics = [#tpu.dimension_semantics<arbitrary>], iteration_bounds = array<i64: 1>, scalar_prefetch = 0 : i64, scratch_operands = 0 : i64, tpu.core_type = #tpu.core_type<tc>, window_params = [{transform_indices = @transform_0, window_bounds = array<i64: 64, 32>}, {pipeline_mode = #tpu.pipeline_mode<synchronous>, transform_indices = @transform_1, window_bounds = array<i64: 64, 64>}, {pipeline_mode = #tpu.pipeline_mode<synchronous>, transform_indices = @transform_2, window_bounds = array<i64: 32, 96>}, {pipeline_mode = #tpu.pipeline_mode<synchronous>, transform_indices = @transform_3, window_bounds = array<i64: 32, 32>}, {pipeline_mode = #tpu.pipeline_mode<synchronous>, transform_indices = @transform_4, window_bounds = array<i64: 32, 128>}, {pipeline_mode = #tpu.pipeline_mode<synchronous>, transform_indices = @transform_5, window_bounds = array<i64: 1, 128>}, {pipeline_mode = #tpu.pipeline_mode<synchronous>, transform_indices = @transform_6, window_bounds = array<i64: 128, 32>}, {pipeline_mode = #tpu.pipeline_mode<synchronous>, transform_indices = @transform_7, window_bounds = array<i64: 6, 32>}, {transform_indices = @transform_8, window_bounds = array<i64: 64, 32>}]} {
    %c0 = arith.constant 0 : index
    %c0_0 = arith.constant 0 : index
    %0 = vector.load %arg1[%c0, %c0_0] : memref<64x32xf32, #tpu.memory_space<vmem>>, vector<64x32xf32>
    %c0_1 = arith.constant 0 : index
    %c0_2 = arith.constant 0 : index
    %1 = vector.load %arg3[%c0_1, %c0_2] : memref<32x96xf32, #tpu.memory_space<vmem>>, vector<32x96xf32>
    %cst = arith.constant dense<0.000000e+00> : vector<64x96xf32>
    %2 = tpu.matmul %0, %1, %cst {dimension_numbers = #tpu.dot_dimension_numbers<[1], [0], [0], [1], [0, 0, 1, 1], [], []>} : vector<64x32xf32>, vector<32x96xf32>, vector<64x96xf32> -> vector<64x96xf32>
    %3 = vector.extract_strided_slice %2 {offsets = [0, 0], sizes = [64, 32], strides = [1, 1]} : vector<64x96xf32> to vector<64x32xf32>
    %4 = vector.extract_strided_slice %2 {offsets = [0, 32], sizes = [64, 32], strides = [1, 1]} : vector<64x96xf32> to vector<64x32xf32>
    %5 = vector.extract_strided_slice %2 {offsets = [0, 64], sizes = [64, 32], strides = [1, 1]} : vector<64x96xf32> to vector<64x32xf32>
    %cst_3 = arith.constant dense<0.000000e+00> : vector<64x64xf32>
    %6 = tpu.matmul %3, %4, %cst_3 {dimension_numbers = #tpu.dot_dimension_numbers<[1], [1], [0], [0], [0, 0, 1, 0], [], []>} : vector<64x32xf32>, vector<64x32xf32>, vector<64x64xf32> -> vector<64x64xf32>
    %cst_4 = arith.constant 0.176776692 : f32
    %7 = vector.broadcast %cst_4 : f32 to vector<64x64xf32>
    %8 = arith.mulf %6, %7 : vector<64x64xf32>
    %c0_5 = arith.constant 0 : index
    %c0_6 = arith.constant 0 : index
    %9 = vector.load %arg2[%c0_5, %c0_6] : memref<64x64xf32, #tpu.memory_space<vmem>>, vector<64x64xf32>
    %10 = arith.addf %8, %9 : vector<64x64xf32>
    %cst_7 = arith.constant dense<0xFF800000> : vector<64xf32>
    %11 = vector.multi_reduction <maximumf>, %10, %cst_7 [1] : vector<64x64xf32> to vector<64xf32>
    %12 = vector.shape_cast %11 : vector<64xf32> to vector<64x1xf32>
    %13 = vector.broadcast %12 : vector<64x1xf32> to vector<64x64xf32>
    %14 = arith.subf %10, %13 : vector<64x64xf32>
    %15 = math.exp %14 : vector<64x64xf32>
    %cst_8 = arith.constant dense<0.000000e+00> : vector<64xf32>
    %16 = vector.multi_reduction <add>, %15, %cst_8 [1] : vector<64x64xf32> to vector<64xf32>
    %17 = vector.shape_cast %16 : vector<64xf32> to vector<64x1xf32>
    %18 = vector.broadcast %17 : vector<64x1xf32> to vector<64x64xf32>
    %19 = arith.divf %15, %18 : vector<64x64xf32>
    %cst_9 = arith.constant dense<0.000000e+00> : vector<64x32xf32>
    %20 = tpu.matmul %19, %5, %cst_9 {dimension_numbers = #tpu.dot_dimension_numbers<[1], [0], [0], [1], [0, 0, 1, 1], [], []>} : vector<64x64xf32>, vector<64x32xf32>, vector<64x32xf32> -> vector<64x32xf32>
    %c0_10 = arith.constant 0 : index
    %c0_11 = arith.constant 0 : index
    %21 = vector.load %arg8[%c0_10, %c0_11] : memref<6x32xf32, #tpu.memory_space<vmem>>, vector<6x32xf32>
    %22 = vector.extract_strided_slice %21 {offsets = [0, 0], sizes = [1, 32], strides = [1, 1]} : vector<6x32xf32> to vector<1x32xf32>
    %23 = vector.extract_strided_slice %21 {offsets = [1, 0], sizes = [1, 32], strides = [1, 1]} : vector<6x32xf32> to vector<1x32xf32>
    %24 = vector.extract_strided_slice %21 {offsets = [2, 0], sizes = [1, 32], strides = [1, 1]} : vector<6x32xf32> to vector<1x32xf32>
    %25 = vector.extract_strided_slice %21 {offsets = [3, 0], sizes = [1, 32], strides = [1, 1]} : vector<6x32xf32> to vector<1x32xf32>
    %26 = vector.extract_strided_slice %21 {offsets = [4, 0], sizes = [1, 32], strides = [1, 1]} : vector<6x32xf32> to vector<1x32xf32>
    %27 = vector.extract_strided_slice %21 {offsets = [5, 0], sizes = [1, 32], strides = [1, 1]} : vector<6x32xf32> to vector<1x32xf32>
    %c0_12 = arith.constant 0 : index
    %c0_13 = arith.constant 0 : index
    %28 = vector.load %arg4[%c0_12, %c0_13] : memref<32x32xf32, #tpu.memory_space<vmem>>, vector<32x32xf32>
    %cst_14 = arith.constant dense<0.000000e+00> : vector<64x32xf32>
    %29 = tpu.matmul %20, %28, %cst_14 {dimension_numbers = #tpu.dot_dimension_numbers<[1], [0], [0], [1], [0, 0, 1, 1], [], []>} : vector<64x32xf32>, vector<32x32xf32>, vector<64x32xf32> -> vector<64x32xf32>
    %30 = vector.broadcast %22 : vector<1x32xf32> to vector<64x32xf32>
    %31 = arith.addf %29, %30 : vector<64x32xf32>
    %32 = arith.addf %0, %31 : vector<64x32xf32>
    %cst_15 = arith.constant dense<0.000000e+00> : vector<64xf32>
    %33 = vector.multi_reduction <add>, %32, %cst_15 [1] : vector<64x32xf32> to vector<64xf32>
    %34 = vector.shape_cast %33 : vector<64xf32> to vector<64x1xf32>
    %cst_16 = arith.constant 3.200000e+01 : f32
    %35 = vector.broadcast %cst_16 : f32 to vector<64x1xf32>
    %36 = arith.divf %34, %35 : vector<64x1xf32>
    %37 = vector.broadcast %36 : vector<64x1xf32> to vector<64x32xf32>
    %38 = arith.subf %32, %37 : vector<64x32xf32>
    %39 = arith.mulf %38, %38 : vector<64x32xf32>
    %cst_17 = arith.constant dense<0.000000e+00> : vector<64xf32>
    %40 = vector.multi_reduction <add>, %39, %cst_17 [1] : vector<64x32xf32> to vector<64xf32>
    %41 = vector.shape_cast %40 : vector<64xf32> to vector<64x1xf32>
    %cst_18 = arith.constant 3.200000e+01 : f32
    %42 = vector.broadcast %cst_18 : f32 to vector<64x1xf32>
    %43 = arith.divf %41, %42 : vector<64x1xf32>
    %cst_19 = arith.constant 9.99999974E-6 : f32
    %44 = vector.broadcast %cst_19 : f32 to vector<64x1xf32>
    %45 = arith.addf %43, %44 : vector<64x1xf32>
    %46 = math.rsqrt %45 : vector<64x1xf32>
    %47 = vector.broadcast %36 : vector<64x1xf32> to vector<64x32xf32>
    %48 = arith.subf %32, %47 : vector<64x32xf32>
    %49 = vector.broadcast %46 : vector<64x1xf32> to vector<64x32xf32>
    %50 = arith.mulf %48, %49 : vector<64x32xf32>
    %51 = vector.broadcast %24 : vector<1x32xf32> to vector<64x32xf32>
    %52 = arith.mulf %50, %51 : vector<64x32xf32>
    %53 = vector.broadcast %25 : vector<1x32xf32> to vector<64x32xf32>
    %54 = arith.addf %52, %53 : vector<64x32xf32>
    %c0_20 = arith.constant 0 : index
    %c0_21 = arith.constant 0 : index
    %55 = vector.load %arg5[%c0_20, %c0_21] : memref<32x128xf32, #tpu.memory_space<vmem>>, vector<32x128xf32>
    %cst_22 = arith.constant dense<0.000000e+00> : vector<64x128xf32>
    %56 = tpu.matmul %54, %55, %cst_22 {dimension_numbers = #tpu.dot_dimension_numbers<[1], [0], [0], [1], [0, 0, 1, 1], [], []>} : vector<64x32xf32>, vector<32x128xf32>, vector<64x128xf32> -> vector<64x128xf32>
    %c0_23 = arith.constant 0 : index
    %c0_24 = arith.constant 0 : index
    %57 = vector.load %arg6[%c0_23, %c0_24] : memref<1x128xf32, #tpu.memory_space<vmem>>, vector<1x128xf32>
    %58 = vector.broadcast %57 : vector<1x128xf32> to vector<64x128xf32>
    %59 = arith.addf %56, %58 : vector<64x128xf32>
    %cst_25 = arith.constant 0.000000e+00 : f32
    %60 = vector.broadcast %cst_25 : f32 to vector<64x128xf32>
    %61 = arith.maximumf %59, %60 : vector<64x128xf32>
    %c0_26 = arith.constant 0 : index
    %c0_27 = arith.constant 0 : index
    %62 = vector.load %arg7[%c0_26, %c0_27] : memref<128x32xf32, #tpu.memory_space<vmem>>, vector<128x32xf32>
    %cst_28 = arith.constant dense<0.000000e+00> : vector<64x32xf32>
    %63 = tpu.matmul %61, %62, %cst_28 {dimension_numbers = #tpu.dot_dimension_numbers<[1], [0], [0], [1], [0, 0, 1, 1], [], []>} : vector<64x128xf32>, vector<128x32xf32>, vector<64x32xf32> -> vector<64x32xf32>
    %64 = vector.broadcast %23 : vector<1x32xf32> to vector<64x32xf32>
    %65 = arith.addf %63, %64 : vector<64x32xf32>
    %66 = arith.addf %54, %65 : vector<64x32xf32>
    %cst_29 = arith.constant dense<0.000000e+00> : vector<64xf32>
    %67 = vector.multi_reduction <add>, %66, %cst_29 [1] : vector<64x32xf32> to vector<64xf32>
    %68 = vector.shape_cast %67 : vector<64xf32> to vector<64x1xf32>
    %cst_30 = arith.constant 3.200000e+01 : f32
    %69 = vector.broadcast %cst_30 : f32 to vector<64x1xf32>
    %70 = arith.divf %68, %69 : vector<64x1xf32>
    %71 = vector.broadcast %70 : vector<64x1xf32> to vector<64x32xf32>
    %72 = arith.subf %66, %71 : vector<64x32xf32>
    %73 = arith.mulf %72, %72 : vector<64x32xf32>
    %cst_31 = arith.constant dense<0.000000e+00> : vector<64xf32>
    %74 = vector.multi_reduction <add>, %73, %cst_31 [1] : vector<64x32xf32> to vector<64xf32>
    %75 = vector.shape_cast %74 : vector<64xf32> to vector<64x1xf32>
    %cst_32 = arith.constant 3.200000e+01 : f32
    %76 = vector.broadcast %cst_32 : f32 to vector<64x1xf32>
    %77 = arith.divf %75, %76 : vector<64x1xf32>
    %cst_33 = arith.constant 9.99999974E-6 : f32
    %78 = vector.broadcast %cst_33 : f32 to vector<64x1xf32>
    %79 = arith.addf %77, %78 : vector<64x1xf32>
    %80 = math.rsqrt %79 : vector<64x1xf32>
    %81 = vector.broadcast %70 : vector<64x1xf32> to vector<64x32xf32>
    %82 = arith.subf %66, %81 : vector<64x32xf32>
    %83 = vector.broadcast %80 : vector<64x1xf32> to vector<64x32xf32>
    %84 = arith.mulf %82, %83 : vector<64x32xf32>
    %85 = vector.broadcast %26 : vector<1x32xf32> to vector<64x32xf32>
    %86 = arith.mulf %84, %85 : vector<64x32xf32>
    %87 = vector.broadcast %27 : vector<1x32xf32> to vector<64x32xf32>
    %88 = arith.addf %86, %87 : vector<64x32xf32>
    %c0_34 = arith.constant 0 : index
    %c0_35 = arith.constant 0 : index
    %89 = vector.load %arg9[%c0_34, %c0_35] : memref<64x32xf32, #tpu.memory_space<vmem>>, vector<64x32xf32>
    tpu.vector_store %arg9[%c0_34, %c0_35], %88 {strides = array<i32>} : memref<64x32xf32, #tpu.memory_space<vmem>>, vector<64x32xf32>,
    return
  }
  func.func @transform_0(%arg0: i32) -> (i32, i32) {
    %c0_i32 = arith.constant 0 : i32
    %c0_i32_0 = arith.constant 0 : i32
    return %arg0, %c0_i32 : i32, i32
  }
  func.func @transform_1(%arg0: i32) -> (i32, i32) {
    %c0_i32 = arith.constant 0 : i32
    %c0_i32_0 = arith.constant 0 : i32
    %c0_i32_1 = arith.constant 0 : i32
    return %c0_i32, %c0_i32_0 : i32, i32
  }
  func.func @transform_2(%arg0: i32) -> (i32, i32) {
    %c0_i32 = arith.constant 0 : i32
    %c0_i32_0 = arith.constant 0 : i32
    %c0_i32_1 = arith.constant 0 : i32
    return %c0_i32, %c0_i32_0 : i32, i32
  }
  func.func @transform_3(%arg0: i32) -> (i32, i32) {
    %c0_i32 = arith.constant 0 : i32
    %c0_i32_0 = arith.constant 0 : i32
    %c0_i32_1 = arith.constant 0 : i32
    return %c0_i32, %c0_i32_0 : i32, i32
  }
  func.func @transform_4(%arg0: i32) -> (i32, i32) {
    %c0_i32 = arith.constant 0 : i32
    %c0_i32_0 = arith.constant 0 : i32
    %c0_i32_1 = arith.constant 0 : i32
    return %c0_i32, %c0_i32_0 : i32, i32
  }
  func.func @transform_5(%arg0: i32) -> (i32, i32) {
    %c0_i32 = arith.constant 0 : i32
    %c0_i32_0 = arith.constant 0 : i32
    %c0_i32_1 = arith.constant 0 : i32
    return %c0_i32, %c0_i32_0 : i32, i32
  }
  func.func @transform_6(%arg0: i32) -> (i32, i32) {
    %c0_i32 = arith.constant 0 : i32
    %c0_i32_0 = arith.constant 0 : i32
    %c0_i32_1 = arith.constant 0 : i32
    return %c0_i32, %c0_i32_0 : i32, i32
  }
  func.func @transform_7(%arg0: i32) -> (i32, i32) {
    %c0_i32 = arith.constant 0 : i32
    %c0_i32_0 = arith.constant 0 : i32
    %c0_i32_1 = arith.constant 0 : i32
    return %c0_i32, %c0_i32_0 : i32, i32
  }
  func.func @transform_8(%arg0: i32) -> (i32, i32) {
    %c0_i32 = arith.constant 0 : i32
    %c0_i32_0 = arith.constant 0 : i32
    return %arg0, %c0_i32 : i32, i32
  }
}

</mosaic_0001>

<llo_original>
// kernel: tpu_custom_call.1
$region0: #{tpu_custom_call.1}
  #allocation0 [shape = 'u32[]', space=smem, size = 0x4, offset = 0x4, fixed_abs, tag = 'smem constant byte address 0x4 - core index']
  #allocation1 [shape = 'u32[144,128]{1,0:T(1,128)}', space=vmem, size = 0x12000, scoped, tag = 'internal scratch']
  %s0 = inlined_call_operand.vmem [shape: f32[64,32], index: 0, kind: input, shape index: {}]
  %s1 = inlined_call_operand.vmem [shape: f32[64,64], index: 1, kind: input, shape index: {}]
  %s2 = inlined_call_operand.vmem [shape: f32[32,96], index: 2, kind: input, shape index: {}]
  %s3 = inlined_call_operand.vmem [shape: f32[32,32], index: 3, kind: input, shape index: {}]
  %s4 = inlined_call_operand.vmem [shape: f32[32,128], index: 4, kind: input, shape index: {}]
  %s5 = inlined_call_operand.vmem [shape: f32[1,128], index: 5, kind: input, shape index: {}]
  %s6 = inlined_call_operand.vmem [shape: f32[128,32], index: 6, kind: input, shape index: {}]
  %s7 = inlined_call_operand.vmem [shape: f32[6,32], index: 7, kind: input, shape index: {}]
  %s8 = inlined_call_operand.vmem [shape: f32[64,32], index: 8, kind: output, shape index: {}]
  %s9 = sld [smem:[#allocation0]]
  $region42: #{tpu_custom_call.1} parent=0
    _
  %s11 = ssub.s32 1, %s9
  %s12 = scalar_select 0, %s11, %s9
  // Predicated region
  $region2: #{tpu_custom_call.1} parent=0 // pred_check
    _
  $region3: #{tpu_custom_call.1} parent=0 // pred_check_branch
    %14 = sbr.rel (0) target = $region5
  $region4: #{tpu_custom_call.1} parent=0 // pred_region
    _
  $region5: #{tpu_custom_call.1} parent=0 // pred_fallthru
    _
  // Predicated region
  $region6: #{tpu_custom_call.1} parent=0 // pred_check
    _
  $region7: #{tpu_custom_call.1} parent=0 // pred_check_branch
    %16 = sbr.rel (0) target = $region9
  $region8: #{tpu_custom_call.1} parent=0 // pred_region
    _
  $region9: #{tpu_custom_call.1} parent=0 // pred_fallthru
    _
  // Predicated region
  $region10: #{tpu_custom_call.1} parent=0 // pred_check
    _
  $region11: #{tpu_custom_call.1} parent=0 // pred_check_branch
    %18 = sbr.rel (0) target = $region13
  $region12: #{tpu_custom_call.1} parent=0 // pred_region
    _
  $region13: #{tpu_custom_call.1} parent=0 // pred_fallthru
    _
  // Predicated region
  $region14: #{tpu_custom_call.1} parent=0 // pred_check
    _
  $region15: #{tpu_custom_call.1} parent=0 // pred_check_branch
    %20 = sbr.rel (0) target = $region17
  $region16: #{tpu_custom_call.1} parent=0 // pred_region
    _
  $region17: #{tpu_custom_call.1} parent=0 // pred_fallthru
    _
  // Predicated region
  $region18: #{tpu_custom_call.1} parent=0 // pred_check
    _
  $region19: #{tpu_custom_call.1} parent=0 // pred_check_branch
    %22 = sbr.rel (0) target = $region21
  $region20: #{tpu_custom_call.1} parent=0 // pred_region
    _
  $region21: #{tpu_custom_call.1} parent=0 // pred_fallthru
    _
  // Predicated region
  $region22: #{tpu_custom_call.1} parent=0 // pred_check
    _
  $region23: #{tpu_custom_call.1} parent=0 // pred_check_branch
    %24 = sbr.rel (0) target = $region25
  $region24: #{tpu_custom_call.1} parent=0 // pred_region
    _
  $region25: #{tpu_custom_call.1} parent=0 // pred_fallthru
    _
  // Predicated region
  $region26: #{tpu_custom_call.1} parent=0 // pred_check
    _
  $region27: #{tpu_custom_call.1} parent=0 // pred_check_branch
    %26 = sbr.rel (0) target = $region29
  $region28: #{tpu_custom_call.1} parent=0 // pred_region
    _
  $region29: #{tpu_custom_call.1} parent=0 // pred_fallthru
    _
  // Predicated region
  $region30: #{tpu_custom_call.1} parent=0 // pred_check
    _
  $region31: #{tpu_custom_call.1} parent=0 // pred_check_branch
    %28 = sbr.rel (0) target = $region33
  $region32: #{tpu_custom_call.1} parent=0 // pred_region
    _
  $region33: #{tpu_custom_call.1} parent=0 // pred_fallthru
    _
  %v29 = vld [vmem:[%s0] sm:$0xff]
  %v30 = vld [vmem:[%s0 + $0x8] sm:$0xff]
  %v31 = vld [vmem:[%s0 + $0x10] sm:$0xff]
  %v32 = vld [vmem:[%s0 + $0x18] sm:$0xff]
  %v33 = vld [vmem:[%s0 + $0x20] sm:$0xff]
  %v34 = vld [vmem:[%s0 + $0x28] sm:$0xff]
  %v35 = vld [vmem:[%s0 + $0x30] sm:$0xff]
  %v36 = vld [vmem:[%s0 + $0x38] sm:$0xff]
  %v37 = vld [vmem:[%s2] sm:$0xff]
  %v38 = vld [vmem:[%s2 + $0x8] sm:$0xff]
  %v39 = vld [vmem:[%s2 + $0x10] sm:$0xff]
  %v40 = vld [vmem:[%s2 + $0x18] sm:$0xff]
  %vm41 = vcmask 261120
  %v43 = vsel %vm41, %v29, 0
  %v46 = vsel %vm41, %v30, 0
  %v49 = vsel %vm41, %v31, 0
  %v52 = vsel %vm41, %v32, 0
  %v55 = vsel %vm41, %v33, 0
  %v58 = vsel %vm41, %v34, 0
  %v61 = vsel %vm41, %v35, 0
  %v64 = vsel %vm41, %v36, 0
  %66 = vmatprep.subr.mxu0 0.0
  %67 = vmatpush1.msra.mxu0 %v37
  %68 = vmatprep.subr.mxu0 0.0
  %69 = vmatpush1.msra.mxu0 %v38
  %70 = vmatprep.subr.mxu0 0.0
  %71 = vmatpush1.msra.mxu0 %v39
  %72 = vmatprep.subr.mxu0 0.0
  %73 = vmatpush1.msra.mxu0 %v40
  %74 = vmatprep.subr.mxu0 0.0
  %75 = vmatpush1.msra.mxu0 0.0
  %76 = vmatprep.subr.mxu0 0.0
  %77 = vmatpush1.msra.mxu0 0.0
  %78 = vmatprep.subr.mxu0 0.0
  %79 = vmatpush1.msra.mxu0 0.0
  %80 = vmatprep.subr.mxu0 0.0
  %81 = vmatpush1.msra.mxu0 0.0
  %82 = vmatprep.subr.mxu0 0.0
  %83 = vmatpush1.msra.mxu0 0.0
  %84 = vmatprep.subr.mxu0 0.0
  %85 = vmatpush1.msra.mxu0 0.0
  %86 = vmatprep.subr.mxu0 0.0
  %87 = vmatpush1.msra.mxu0 0.0
  %88 = vmatprep.subr.mxu0 0.0
  %89 = vmatpush1.msra.mxu0 0.0
  %90 = vmatprep.subr.mxu0 0.0
  %91 = vmatpush1.msra.mxu0 0.0
  %92 = vmatprep.subr.mxu0 0.0
  %93 = vmatpush1.msra.mxu0 0.0
  %94 = vmatprep.subr.mxu0 0.0
  %95 = vmatpush1.msra.mxu0 0.0
  %96 = vmatprep.subr.mxu0 0.0
  %97 = vmatpush1.msra.mxu0 0.0
  %98 = vmatprep.subr.mxu0 0.0
  %99 = vmatpush1.msra.mxu0 0.0
  %100 = vmatprep.subr.mxu0 0.0
  %101 = vmatpush1.msra.mxu0 0.0
  %102 = vmatprep.subr.mxu0 0.0
  %103 = vmatpush1.msra.mxu0 0.0
  %104 = vmatprep.subr.mxu0 0.0
  %105 = vmatpush1.msra.mxu0 0.0
  %106 = vmatprep.subr.mxu0 0.0
  %107 = vmatpush1.msra.mxu0 0.0
  %108 = vmatprep.subr.mxu0 0.0
  %109 = vmatpush1.msra.mxu0 0.0
  %110 = vmatprep.subr.mxu0 0.0
  %111 = vmatpush1.msra.mxu0 0.0
  %112 = vmatprep.subr.mxu0 0.0
  %113 = vmatpush1.msra.mxu0 0.0
  %114 = vmatprep.subr.mxu0 0.0
  %115 = vmatpush1.msra.mxu0 0.0
  %116 = vmatprep.subr.mxu0 0.0
  %117 = vmatpush1.msra.mxu0 0.0
  %118 = vmatprep.subr.mxu0 0.0
  %119 = vmatpush1.msra.mxu0 0.0
  %120 = vmatprep.subr.mxu0 0.0
  %121 = vmatpush1.msra.mxu0 0.0
  %122 = vmatprep.subr.mxu0 0.0
  %123 = vmatpush1.msra.mxu0 0.0
  %124 = vmatprep.subr.mxu0 0.0
  %125 = vmatpush1.msra.mxu0 0.0
  %126 = vmatprep.subr.mxu0 0.0
  %127 = vmatpush1.msra.mxu0 0.0
  %128 = vmatprep.subr.mxu0 0.0
  %129 = vmatpush1.msra.mxu0 0.0
  %130 = vmatprep.mubr.f32.mxu0 0.0
  %131 = vmatmul.mubr.f32.gmra.mrb[0].mxu0 %v43
  %v132 = vpop.f32.mrb[0].mxu0
  %v133 = vadd.f32 0.0, %v132
  %v134 = vpop.f32.mrb[0].mxu0
  %135 = vmatprep.mubr.f32.mxu0 0.0
  %136 = vmatmul.mubr.f32.gmra.mrb[0].mxu0 %v46
  %v137 = vpop.f32.mrb[0].mxu0
  %v138 = vadd.f32 0.0, %v137
  %v139 = vpop.f32.mrb[0].mxu0
  %140 = vmatprep.mubr.f32.mxu0 0.0
  %141 = vmatmul.mubr.f32.gmra.mrb[0].mxu0 %v49
  %v142 = vpop.f32.mrb[0].mxu0
  %v143 = vadd.f32 0.0, %v142
  %v144 = vpop.f32.mrb[0].mxu0
  %145 = vmatprep.mubr.f32.mxu0 0.0
  %146 = vmatmul.mubr.f32.gmra.mrb[0].mxu0 %v52
  %v147 = vpop.f32.mrb[0].mxu0
  %v148 = vadd.f32 0.0, %v147
  %v149 = vpop.f32.mrb[0].mxu0
  %150 = vmatprep.mubr.f32.mxu0 0.0
  %151 = vmatmul.mubr.f32.gmra.mrb[0].mxu0 %v55
  %v152 = vpop.f32.mrb[0].mxu0
  %v153 = vadd.f32 0.0, %v152
  %v154 = vpop.f32.mrb[0].mxu0
  %155 = vmatprep.mubr.f32.mxu0 0.0
  %156 = vmatmul.mubr.f32.gmra.mrb[0].mxu0 %v58
  %v157 = vpop.f32.mrb[0].mxu0
  %v158 = vadd.f32 0.0, %v157
  %v159 = vpop.f32.mrb[0].mxu0
  %160 = vmatprep.mubr.f32.mxu0 0.0
  %161 = vmatmul.mubr.f32.gmra.mrb[0].mxu0 %v61
  %v162 = vpop.f32.mrb[0].mxu0
  %v163 = vadd.f32 0.0, %v162
  %v164 = vpop.f32.mrb[0].mxu0
  %165 = vmatprep.mubr.f32.mxu0 0.0
  %166 = vmatmul.mubr.f32.gmra.mrb[0].mxu0 %v64
  %v167 = vpop.f32.mrb[0].mxu0
  %v168 = vadd.f32 0.0, %v167
  %v169 = vpop.f32.mrb[0].mxu0
  %170 = vdwg.mxu0
  %179 = vrot.lane.b32.xlu0 %v133, 96
  %v180 = vpop.permute.xlu0 %179
  %181 = vrot.lane.b32.xlu0 %v138, 96
  %v182 = vpop.permute.xlu0 %181
  %183 = vrot.lane.b32.xlu0 %v143, 96
  %v184 = vpop.permute.xlu0 %183
  %185 = vrot.lane.b32.xlu0 %v148, 96
  %v186 = vpop.permute.xlu0 %185
  %187 = vrot.lane.b32.xlu0 %v153, 96
  %v188 = vpop.permute.xlu0 %187
  %189 = vrot.lane.b32.xlu0 %v158, 96
  %v190 = vpop.permute.xlu0 %189
  %191 = vrot.lane.b32.xlu0 %v163, 96
  %v192 = vpop.permute.xlu0 %191
  %193 = vrot.lane.b32.xlu0 %v168, 96
  %v194 = vpop.permute.xlu0 %193
  %v195 = vsel %vm41, %v133, 0
  %v197 = vsel %vm41, %v138, 0
  %v199 = vsel %vm41, %v143, 0
  %v201 = vsel %vm41, %v148, 0
  %v203 = vsel %vm41, %v153, 0
  %v205 = vsel %vm41, %v158, 0
  %v207 = vsel %vm41, %v163, 0
  %v209 = vsel %vm41, %v168, 0
  %v211 = vsel %vm41, %v180, 0
  %v213 = vsel %vm41, %v182, 0
  %v215 = vsel %vm41, %v184, 0
  %v217 = vsel %vm41, %v186, 0
  %v219 = vsel %vm41, %v188, 0
  %v221 = vsel %vm41, %v190, 0
  %v223 = vsel %vm41, %v192, 0
  %v225 = vsel %vm41, %v194, 0
  %227 = vmatprep.subr.mxu0 0.0
  %228 = vmatpush1.xpose.msra.mxu0 %v211
  %229 = vmatprep.subr.mxu0 0.0
  %230 = vmatpush1.xpose.msra.mxu0 %v213
  %231 = vmatprep.subr.mxu0 0.0
  %232 = vmatpush1.xpose.msra.mxu0 %v215
  %233 = vmatprep.subr.mxu0 0.0
  %234 = vmatpush1.xpose.msra.mxu0 %v217
  %235 = vmatprep.subr.mxu0 0.0
  %236 = vmatpush1.xpose.msra.mxu0 %v219
  %237 = vmatprep.subr.mxu0 0.0
  %238 = vmatpush1.xpose.msra.mxu0 %v221
  %239 = vmatprep.subr.mxu0 0.0
  %240 = vmatpush1.xpose.msra.mxu0 %v223
  %241 = vmatprep.subr.mxu0 0.0
  %242 = vmatpush1.xpose.msra.mxu0 %v225
  %243 = vmatprep.subr.mxu0 0.0
  %244 = vmatpush1.xpose.msra.mxu0 0.0
  %245 = vmatprep.subr.mxu0 0.0
  %246 = vmatpush1.xpose.msra.mxu0 0.0
  %247 = vmatprep.subr.mxu0 0.0
  %248 = vmatpush1.xpose.msra.mxu0 0.0
  %249 = vmatprep.subr.mxu0 0.0
  %250 = vmatpush1.xpose.msra.mxu0 0.0
  %251 = vmatprep.subr.mxu0 0.0
  %252 = vmatpush1.xpose.msra.mxu0 0.0
  %253 = vmatprep.subr.mxu0 0.0
  %254 = vmatpush1.xpose.msra.mxu0 0.0
  %255 = vmatprep.subr.mxu0 0.0
  %256 = vmatpush1.xpose.msra.mxu0 0.0
  %257 = vmatprep.subr.mxu0 0.0
  %258 = vmatpush1.xpose.msra.mxu0 0.0
  %259 = vmatprep.subr.mxu0 0.0
  %260 = vmatpush1.xpose.msra.mxu0 0.0
  %261 = vmatprep.subr.mxu0 0.0
  %262 = vmatpush1.xpose.msra.mxu0 0.0
  %263 = vmatprep.subr.mxu0 0.0
  %264 = vmatpush1.xpose.msra.mxu0 0.0
  %265 = vmatprep.subr.mxu0 0.0
  %266 = vmatpush1.xpose.msra.mxu0 0.0
  %267 = vmatprep.subr.mxu0 0.0
  %268 = vmatpush1.xpose.msra.mxu0 0.0
  %269 = vmatprep.subr.mxu0 0.0
  %270 = vmatpush1.xpose.msra.mxu0 0.0
  %271 = vmatprep.subr.mxu0 0.0
  %272 = vmatpush1.xpose.msra.mxu0 0.0
  %273 = vmatprep.subr.mxu0 0.0
  %274 = vmatpush1.xpose.msra.mxu0 0.0
  %275 = vmatprep.subr.mxu0 0.0
  %276 = vmatpush1.xpose.msra.mxu0 0.0
  %277 = vmatprep.subr.mxu0 0.0
  %278 = vmatpush1.xpose.msra.mxu0 0.0
  %279 = vmatprep.subr.mxu0 0.0
  %280 = vmatpush1.xpose.msra.mxu0 0.0
  %281 = vmatprep.subr.mxu0 0.0
  %282 = vmatpush1.xpose.msra.mxu0 0.0
  %283 = vmatprep.subr.mxu0 0.0
  %284 = vmatpush1.xpose.msra.mxu0 0.0
  %285 = vmatprep.subr.mxu0 0.0
  %286 = vmatpush1.xpose.msra.mxu0 0.0
  %287 = vmatprep.subr.mxu0 0.0
  %288 = vmatpush1.xpose.msra.mxu0 0.0
  %289 = vmatprep.subr.mxu0 0.0
  %290 = vmatpush1.xpose.msra.mxu0 0.0
  %291 = vmatprep.mubr.f32.mxu0 0.0
  %292 = vmatmul.mubr.f32.gmra.mrb[0].mxu0 %v195
  %v293 = vpop.f32.mrb[0].mxu0
  %v294 = vadd.f32 0.0, %v293
  %v295 = vpop.f32.mrb[0].mxu0
  %296 = vmatprep.mubr.f32.mxu0 0.0
  %297 = vmatmul.mubr.f32.gmra.mrb[0].mxu0 %v197
  %v298 = vpop.f32.mrb[0].mxu0
  %v299 = vadd.f32 0.0, %v298
  %v300 = vpop.f32.mrb[0].mxu0
  %301 = vmatprep.mubr.f32.mxu0 0.0
  %302 = vmatmul.mubr.f32.gmra.mrb[0].mxu0 %v199
  %v303 = vpop.f32.mrb[0].mxu0
  %v304 = vadd.f32 0.0, %v303
  %v305 = vpop.f32.mrb[0].mxu0
  %306 = vmatprep.mubr.f32.mxu0 0.0
  %307 = vmatmul.mubr.f32.gmra.mrb[0].mxu0 %v201
  %v308 = vpop.f32.mrb[0].mxu0
  %v309 = vadd.f32 0.0, %v308
  %v310 = vpop.f32.mrb[0].mxu0
  %311 = vmatprep.mubr.f32.mxu0 0.0
  %312 = vmatmul.mubr.f32.gmra.mrb[0].mxu0 %v203
  %v313 = vpop.f32.mrb[0].mxu0
  %v314 = vadd.f32 0.0, %v313
  %v315 = vpop.f32.mrb[0].mxu0
  %316 = vmatprep.mubr.f32.mxu0 0.0
  %317 = vmatmul.mubr.f32.gmra.mrb[0].mxu0 %v205
  %v318 = vpop.f32.mrb[0].mxu0
  %v319 = vadd.f32 0.0, %v318
  %v320 = vpop.f32.mrb[0].mxu0
  %321 = vmatprep.mubr.f32.mxu0 0.0
  %322 = vmatmul.mubr.f32.gmra.mrb[0].mxu0 %v207
  %v323 = vpop.f32.mrb[0].mxu0
  %v324 = vadd.f32 0.0, %v323
  %v325 = vpop.f32.mrb[0].mxu0
  %326 = vmatprep.mubr.f32.mxu0 0.0
  %327 = vmatmul.mubr.f32.gmra.mrb[0].mxu0 %v209
  %v328 = vpop.f32.mrb[0].mxu0
  %v329 = vadd.f32 0.0, %v328
  %v330 = vpop.f32.mrb[0].mxu0
  %331 = vdwg.mxu0
  %v332 = vmul.f32 %v294, 0.17677669
  %v333 = vmul.f32 %v299, 0.17677669
  %v334 = vmul.f32 %v304, 0.17677669
  %v335 = vmul.f32 %v309, 0.17677669
  %v336 = vmul.f32 %v314, 0.17677669
  %v337 = vmul.f32 %v319, 0.17677669
  %v338 = vmul.f32 %v324, 0.17677669
  %v339 = vmul.f32 %v329, 0.17677669
  %v340 = vld [vmem:[%s1] sm:$0xff]
  %v341 = vld [vmem:[%s1 + $0x8] sm:$0xff]
  %v342 = vld [vmem:[%s1 + $0x10] sm:$0xff]
  %v343 = vld [vmem:[%s1 + $0x18] sm:$0xff]
  %v344 = vld [vmem:[%s1 + $0x20] sm:$0xff]
  %v345 = vld [vmem:[%s1 + $0x28] sm:$0xff]
  %v346 = vld [vmem:[%s1 + $0x30] sm:$0xff]
  %v347 = vld [vmem:[%s1 + $0x38] sm:$0xff]
  %v348 = vadd.f32 %v332, %v340
  %v349 = vadd.f32 %v333, %v341
  %v350 = vadd.f32 %v334, %v342
  %v351 = vadd.f32 %v335, %v343
  %v352 = vadd.f32 %v336, %v344
  %v353 = vadd.f32 %v337, %v345
  %v354 = vadd.f32 %v338, %v346
  %v355 = vadd.f32 %v339, %v347
  %vm356 = vcmask 523264
  %v357 = vsel %vm356, %v348, -inf
  %358 = vmax.xlane.f32.xlu0 %v357
  %v359 = vpop.xlane.xlu0 %358
  %v360 = vsel %vm356, %v349, -inf
  %361 = vmax.xlane.f32.xlu0 %v360
  %v362 = vpop.xlane.xlu0 %361
  %v363 = vsel %vm356, %v350, -inf
  %364 = vmax.xlane.f32.xlu0 %v363
  %v365 = vpop.xlane.xlu0 %364
  %v366 = vsel %vm356, %v351, -inf
  %367 = vmax.xlane.f32.xlu0 %v366
  %v368 = vpop.xlane.xlu0 %367
  %v369 = vsel %vm356, %v352, -inf
  %370 = vmax.xlane.f32.xlu0 %v369
  %v371 = vpop.xlane.xlu0 %370
  %v372 = vsel %vm356, %v353, -inf
  %373 = vmax.xlane.f32.xlu0 %v372
  %v374 = vpop.xlane.xlu0 %373
  %v375 = vsel %vm356, %v354, -inf
  %376 = vmax.xlane.f32.xlu0 %v375
  %v377 = vpop.xlane.xlu0 %376
  %v378 = vsel %vm356, %v355, -inf
  %379 = vmax.xlane.f32.xlu0 %v378
  %v380 = vpop.xlane.xlu0 %379
  %v381 = vsub.f32 %v348, %v359
  %v382 = vsub.f32 %v349, %v362
  %v383 = vsub.f32 %v350, %v365
  %v384 = vsub.f32 %v351, %v368
  %v385 = vsub.f32 %v352, %v371
  %v386 = vsub.f32 %v353, %v374
  %v387 = vsub.f32 %v354, %v377
  %v388 = vsub.f32 %v355, %v380
  %v389 = vmul.f32 %v381, 1.442695
  %v390 = vpow.pop %v389
  %v391 = vmul.f32 %v382, 1.442695
  %v392 = vpow.pop %v391
  %v393 = vmul.f32 %v383, 1.442695
  %v394 = vpow.pop %v393
  %v395 = vmul.f32 %v384, 1.442695
  %v396 = vpow.pop %v395
  %v397 = vmul.f32 %v385, 1.442695
  %v398 = vpow.pop %v397
  %v399 = vmul.f32 %v386, 1.442695
  %v400 = vpow.pop %v399
  %v401 = vmul.f32 %v387, 1.442695
  %v402 = vpow.pop %v401
  %v403 = vmul.f32 %v388, 1.442695
  %v404 = vpow.pop %v403
  %v405 = vsel %vm356, %v390, 0.0
  %406 = vadd.xlane.f32.xlu0 %v405
  %v407 = vpop.xlane.xlu0 %406
  %v408 = vsel %vm356, %v392, 0.0
  %409 = vadd.xlane.f32.xlu0 %v408
  %v410 = vpop.xlane.xlu0 %409
  %v411 = vsel %vm356, %v394, 0.0
  %412 = vadd.xlane.f32.xlu0 %v411
  %v413 = vpop.xlane.xlu0 %412
  %v414 = vsel %vm356, %v396, 0.0
  %415 = vadd.xlane.f32.xlu0 %v414
  %v416 = vpop.xlane.xlu0 %415
  %v417 = vsel %vm356, %v398, 0.0
  %418 = vadd.xlane.f32.xlu0 %v417
  %v419 = vpop.xlane.xlu0 %418
  %v420 = vsel %vm356, %v400, 0.0
  %421 = vadd.xlane.f32.xlu0 %v420
  %v422 = vpop.xlane.xlu0 %421
  %v423 = vsel %vm356, %v402, 0.0
  %424 = vadd.xlane.f32.xlu0 %v423
  %v425 = vpop.xlane.xlu0 %424
  %v426 = vsel %vm356, %v404, 0.0
  %427 = vadd.xlane.f32.xlu0 %v426
  %v428 = vpop.xlane.xlu0 %427
  %v429 = vrcp.pop %v407
  %v430 = vmul.f32 %v390, %v429
  %v431 = vrcp.pop %v410
  %v432 = vmul.f32 %v392, %v431
  %v433 = vrcp.pop %v413
  %v434 = vmul.f32 %v394, %v433
  %v435 = vrcp.pop %v416
  %v436 = vmul.f32 %v396, %v435
  %v437 = vrcp.pop %v419
  %v438 = vmul.f32 %v398, %v437
  %v439 = vrcp.pop %v422
  %v440 = vmul.f32 %v400, %v439
  %v441 = vrcp.pop %v425
  %v442 = vmul.f32 %v402, %v441
  %v443 = vrcp.pop %v428
  %v444 = vmul.f32 %v404, %v443
  %445 = vrot.lane.b32.xlu0 %v133, 64
  %v446 = vpop.permute.xlu0 %445
  %447 = vrot.lane.b32.xlu0 %v138, 64
  %v448 = vpop.permute.xlu0 %447
  %449 = vrot.lane.b32.xlu0 %v143, 64
  %v450 = vpop.permute.xlu0 %449
  %451 = vrot.lane.b32.xlu0 %v148, 64
  %v452 = vpop.permute.xlu0 %451
  %453 = vrot.lane.b32.xlu0 %v153, 64
  %v454 = vpop.permute.xlu0 %453
  %455 = vrot.lane.b32.xlu0 %v158, 64
  %v456 = vpop.permute.xlu0 %455
  %457 = vrot.lane.b32.xlu0 %v163, 64
  %v458 = vpop.permute.xlu0 %457
  %459 = vrot.lane.b32.xlu0 %v168, 64
  %v460 = vpop.permute.xlu0 %459
  %v470 = vsel %vm356, %v430, 0
  %v473 = vsel %vm356, %v432, 0
  %v476 = vsel %vm356, %v434, 0
  %v479 = vsel %vm356, %v436, 0
  %v482 = vsel %vm356, %v438, 0
  %v485 = vsel %vm356, %v440, 0
  %v488 = vsel %vm356, %v442, 0
  %v491 = vsel %vm356, %v444, 0
  %493 = vmatprep.subr.mxu0 0.0
  %494 = vmatpush1.msra.mxu0 %v446
  %495 = vmatprep.subr.mxu0 0.0
  %496 = vmatpush1.msra.mxu0 %v448
  %497 = vmatprep.subr.mxu0 0.0
  %498 = vmatpush1.msra.mxu0 %v450
  %499 = vmatprep.subr.mxu0 0.0
  %500 = vmatpush1.msra.mxu0 %v452
  %501 = vmatprep.subr.mxu0 0.0
  %502 = vmatpush1.msra.mxu0 %v454
  %503 = vmatprep.subr.mxu0 0.0
  %504 = vmatpush1.msra.mxu0 %v456
  %505 = vmatprep.subr.mxu0 0.0
  %506 = vmatpush1.msra.mxu0 %v458
  %507 = vmatprep.subr.mxu0 0.0
  %508 = vmatpush1.msra.mxu0 %v460
  %509 = vmatprep.subr.mxu0 0.0
  %510 = vmatpush1.msra.mxu0 0.0
  %511 = vmatprep.subr.mxu0 0.0
  %512 = vmatpush1.msra.mxu0 0.0
  %513 = vmatprep.subr.mxu0 0.0
  %514 = vmatpush1.msra.mxu0 0.0
  %515 = vmatprep.subr.mxu0 0.0
  %516 = vmatpush1.msra.mxu0 0.0
  %517 = vmatprep.subr.mxu0 0.0
  %518 = vmatpush1.msra.mxu0 0.0
  %519 = vmatprep.subr.mxu0 0.0
  %520 = vmatpush1.msra.mxu0 0.0
  %521 = vmatprep.subr.mxu0 0.0
  %522 = vmatpush1.msra.mxu0 0.0
  %523 = vmatprep.subr.mxu0 0.0
  %524 = vmatpush1.msra.mxu0 0.0
  %525 = vmatprep.subr.mxu0 0.0
  %526 = vmatpush1.msra.mxu0 0.0
  %527 = vmatprep.subr.mxu0 0.0
  %528 = vmatpush1.msra.mxu0 0.0
  %529 = vmatprep.subr.mxu0 0.0
  %530 = vmatpush1.msra.mxu0 0.0
  %531 = vmatprep.subr.mxu0 0.0
  %532 = vmatpush1.msra.mxu0 0.0
  %533 = vmatprep.subr.mxu0 0.0
  %534 = vmatpush1.msra.mxu0 0.0
  %535 = vmatprep.subr.mxu0 0.0
  %536 = vmatpush1.msra.mxu0 0.0
  %537 = vmatprep.subr.mxu0 0.0
  %538 = vmatpush1.msra.mxu0 0.0
  %539 = vmatprep.subr.mxu0 0.0
  %540 = vmatpush1.msra.mxu0 0.0
  %541 = vmatprep.subr.mxu0 0.0
  %542 = vmatpush1.msra.mxu0 0.0
  %543 = vmatprep.subr.mxu0 0.0
  %544 = vmatpush1.msra.mxu0 0.0
  %545 = vmatprep.subr.mxu0 0.0
  %546 = vmatpush1.msra.mxu0 0.0
  %547 = vmatprep.subr.mxu0 0.0
  %548 = vmatpush1.msra.mxu0 0.0
  %549 = vmatprep.subr.mxu0 0.0
  %550 = vmatpush1.msra.mxu0 0.0
  %551 = vmatprep.subr.mxu0 0.0
  %552 = vmatpush1.msra.mxu0 0.0
  %553 = vmatprep.subr.mxu0 0.0
  %554 = vmatpush1.msra.mxu0 0.0
  %555 = vmatprep.subr.mxu0 0.0
  %556 = vmatpush1.msra.mxu0 0.0
  %557 = vmatprep.mubr.f32.mxu0 0.0
  %558 = vmatmul.mubr.f32.gmra.mrb[0].mxu0 %v470
  %v559 = vpop.f32.mrb[0].mxu0
  %v560 = vadd.f32 0.0, %v559
  %v561 = vpop.f32.mrb[0].mxu0
  %562 = vmatprep.mubr.f32.mxu0 0.0
  %563 = vmatmul.mubr.f32.gmra.mrb[0].mxu0 %v473
  %v564 = vpop.f32.mrb[0].mxu0
  %v565 = vadd.f32 0.0, %v564
  %v566 = vpop.f32.mrb[0].mxu0
  %567 = vmatprep.mubr.f32.mxu0 0.0
  %568 = vmatmul.mubr.f32.gmra.mrb[0].mxu0 %v476
  %v569 = vpop.f32.mrb[0].mxu0
  %v570 = vadd.f32 0.0, %v569
  %v571 = vpop.f32.mrb[0].mxu0
  %572 = vmatprep.mubr.f32.mxu0 0.0
  %573 = vmatmul.mubr.f32.gmra.mrb[0].mxu0 %v479
  %v574 = vpop.f32.mrb[0].mxu0
  %v575 = vadd.f32 0.0, %v574
  %v576 = vpop.f32.mrb[0].mxu0
  %577 = vmatprep.mubr.f32.mxu0 0.0
  %578 = vmatmul.mubr.f32.gmra.mrb[0].mxu0 %v482
  %v579 = vpop.f32.mrb[0].mxu0
  %v580 = vadd.f32 0.0, %v579
  %v581 = vpop.f32.mrb[0].mxu0
  %582 = vmatprep.mubr.f32.mxu0 0.0
  %583 = vmatmul.mubr.f32.gmra.mrb[0].mxu0 %v485
  %v584 = vpop.f32.mrb[0].mxu0
  %v585 = vadd.f32 0.0, %v584
  %v586 = vpop.f32.mrb[0].mxu0
  %587 = vmatprep.mubr.f32.mxu0 0.0
  %588 = vmatmul.mubr.f32.gmra.mrb[0].mxu0 %v488
  %v589 = vpop.f32.mrb[0].mxu0
  %v590 = vadd.f32 0.0, %v589
  %v591 = vpop.f32.mrb[0].mxu0
  %592 = vmatprep.mubr.f32.mxu0 0.0
  %593 = vmatmul.mubr.f32.gmra.mrb[0].mxu0 %v491
  %v594 = vpop.f32.mrb[0].mxu0
  %v595 = vadd.f32 0.0, %v594
  %v596 = vpop.f32.mrb[0].mxu0
  %597 = vdwg.mxu0
  %v598 = vld [vmem:[%s7] sm:$0x3f]
  %v599 = vld [vmem:[%s3] sm:$0xff]
  %v600 = vld [vmem:[%s3 + $0x8] sm:$0xff]
  %v601 = vld [vmem:[%s3 + $0x10] sm:$0xff]
  %v602 = vld [vmem:[%s3 + $0x18] sm:$0xff]
  %v603 = vlaneseq
  %v604 = vshrl.u32 %v603, 7
  %v605 = vsub.s32 0, %v604
  %v606 = vrot.slane %v598, %v605
  %v608 = vsel %vm41, %v560, 0
  %v611 = vsel %vm41, %v565, 0
  %v614 = vsel %vm41, %v570, 0
  %v617 = vsel %vm41, %v575, 0
  %v620 = vsel %vm41, %v580, 0
  %v623 = vsel %vm41, %v585, 0
  %v626 = vsel %vm41, %v590, 0
  %v629 = vsel %vm41, %v595, 0
  %631 = vmatprep.subr.mxu0 0.0
  %632 = vmatpush1.msra.mxu0 %v599
  %633 = vmatprep.subr.mxu0 0.0
  %634 = vmatpush1.msra.mxu0 %v600
  %635 = vmatprep.subr.mxu0 0.0
  %636 = vmatpush1.msra.mxu0 %v601
  %637 = vmatprep.subr.mxu0 0.0
  %638 = vmatpush1.msra.mxu0 %v602
  %639 = vmatprep.subr.mxu0 0.0
  %640 = vmatpush1.msra.mxu0 0.0
  %641 = vmatprep.subr.mxu0 0.0
  %642 = vmatpush1.msra.mxu0 0.0
  %643 = vmatprep.subr.mxu0 0.0
  %644 = vmatpush1.msra.mxu0 0.0
  %645 = vmatprep.subr.mxu0 0.0
  %646 = vmatpush1.msra.mxu0 0.0
  %647 = vmatprep.subr.mxu0 0.0
  %648 = vmatpush1.msra.mxu0 0.0
  %649 = vmatprep.subr.mxu0 0.0
  %650 = vmatpush1.msra.mxu0 0.0
  %651 = vmatprep.subr.mxu0 0.0
  %652 = vmatpush1.msra.mxu0 0.0
  %653 = vmatprep.subr.mxu0 0.0
  %654 = vmatpush1.msra.mxu0 0.0
  %655 = vmatprep.subr.mxu0 0.0
  %656 = vmatpush1.msra.mxu0 0.0
  %657 = vmatprep.subr.mxu0 0.0
  %658 = vmatpush1.msra.mxu0 0.0
  %659 = vmatprep.subr.mxu0 0.0
  %660 = vmatpush1.msra.mxu0 0.0
  %661 = vmatprep.subr.mxu0 0.0
  %662 = vmatpush1.msra.mxu0 0.0
  %663 = vmatprep.subr.mxu0 0.0
  %664 = vmatpush1.msra.mxu0 0.0
  %665 = vmatprep.subr.mxu0 0.0
  %666 = vmatpush1.msra.mxu0 0.0
  %667 = vmatprep.subr.mxu0 0.0
  %668 = vmatpush1.msra.mxu0 0.0
  %669 = vmatprep.subr.mxu0 0.0
  %670 = vmatpush1.msra.mxu0 0.0
  %671 = vmatprep.subr.mxu0 0.0
  %672 = vmatpush1.msra.mxu0 0.0
  %673 = vmatprep.subr.mxu0 0.0
  %674 = vmatpush1.msra.mxu0 0.0
  %675 = vmatprep.subr.mxu0 0.0
  %676 = vmatpush1.msra.mxu0 0.0
  %677 = vmatprep.subr.mxu0 0.0
  %678 = vmatpush1.msra.mxu0 0.0
  %679 = vmatprep.subr.mxu0 0.0
  %680 = vmatpush1.msra.mxu0 0.0
  %681 = vmatprep.subr.mxu0 0.0
  %682 = vmatpush1.msra.mxu0 0.0
  %683 = vmatprep.subr.mxu0 0.0
  %684 = vmatpush1.msra.mxu0 0.0
  %685 = vmatprep.subr.mxu0 0.0
  %686 = vmatpush1.msra.mxu0 0.0
  %687 = vmatprep.subr.mxu0 0.0
  %688 = vmatpush1.msra.mxu0 0.0
  %689 = vmatprep.subr.mxu0 0.0
  %690 = vmatpush1.msra.mxu0 0.0
  %691 = vmatprep.subr.mxu0 0.0
  %692 = vmatpush1.msra.mxu0 0.0
  %693 = vmatprep.subr.mxu0 0.0
  %694 = vmatpush1.msra.mxu0 0.0
  %695 = vmatprep.mubr.f32.mxu0 0.0
  %696 = vmatmul.mubr.f32.gmra.mrb[0].mxu0 %v608
  %v697 = vpop.f32.mrb[0].mxu0
  %v698 = vadd.f32 %v606, %v697
  %v699 = vpop.f32.mrb[0].mxu0
  %700 = vmatprep.mubr.f32.mxu0 0.0
  %701 = vmatmul.mubr.f32.gmra.mrb[0].mxu0 %v611
  %v702 = vpop.f32.mrb[0].mxu0
  %v703 = vadd.f32 %v606, %v702
  %v704 = vpop.f32.mrb[0].mxu0
  %705 = vmatprep.mubr.f32.mxu0 0.0
  %706 = vmatmul.mubr.f32.gmra.mrb[0].mxu0 %v614
  %v707 = vpop.f32.mrb[0].mxu0
  %v708 = vadd.f32 %v606, %v707
  %v709 = vpop.f32.mrb[0].mxu0
  %710 = vmatprep.mubr.f32.mxu0 0.0
  %711 = vmatmul.mubr.f32.gmra.mrb[0].mxu0 %v617
  %v712 = vpop.f32.mrb[0].mxu0
  %v713 = vadd.f32 %v606, %v712
  %v714 = vpop.f32.mrb[0].mxu0
  %715 = vmatprep.mubr.f32.mxu0 0.0
  %716 = vmatmul.mubr.f32.gmra.mrb[0].mxu0 %v620
  %v717 = vpop.f32.mrb[0].mxu0
  %v718 = vadd.f32 %v606, %v717
  %v719 = vpop.f32.mrb[0].mxu0
  %720 = vmatprep.mubr.f32.mxu0 0.0
  %721 = vmatmul.mubr.f32.gmra.mrb[0].mxu0 %v623
  %v722 = vpop.f32.mrb[0].mxu0
  %v723 = vadd.f32 %v606, %v722
  %v724 = vpop.f32.mrb[0].mxu0
  %725 = vmatprep.mubr.f32.mxu0 0.0
  %726 = vmatmul.mubr.f32.gmra.mrb[0].mxu0 %v626
  %v727 = vpop.f32.mrb[0].mxu0
  %v728 = vadd.f32 %v606, %v727
  %v729 = vpop.f32.mrb[0].mxu0
  %730 = vmatprep.mubr.f32.mxu0 0.0
  %731 = vmatmul.mubr.f32.gmra.mrb[0].mxu0 %v629
  %v732 = vpop.f32.mrb[0].mxu0
  %v733 = vadd.f32 %v606, %v732
  %v734 = vpop.f32.mrb[0].mxu0
  %735 = vdwg.mxu0
  %v736 = vadd.f32 %v29, %v698
  %v737 = vadd.f32 %v30, %v703
  %v738 = vadd.f32 %v31, %v708
  %v739 = vadd.f32 %v32, %v713
  %v740 = vadd.f32 %v33, %v718
  %v741 = vadd.f32 %v34, %v723
  %v742 = vadd.f32 %v35, %v728
  %v743 = vadd.f32 %v36, %v733
  %v744 = vsel %vm41, %v736, 0.0
  %745 = vadd.xlane.f32.xlu0 %v744
  %v746 = vpop.xlane.xlu0 %745
  %v747 = vsel %vm41, %v737, 0.0
  %748 = vadd.xlane.f32.xlu0 %v747
  %v749 = vpop.xlane.xlu0 %748
  %v750 = vsel %vm41, %v738, 0.0
  %751 = vadd.xlane.f32.xlu0 %v750
  %v752 = vpop.xlane.xlu0 %751
  %v753 = vsel %vm41, %v739, 0.0
  %754 = vadd.xlane.f32.xlu0 %v753
  %v755 = vpop.xlane.xlu0 %754
  %v756 = vsel %vm41, %v740, 0.0
  %757 = vadd.xlane.f32.xlu0 %v756
  %v758 = vpop.xlane.xlu0 %757
  %v759 = vsel %vm41, %v741, 0.0
  %760 = vadd.xlane.f32.xlu0 %v759
  %v761 = vpop.xlane.xlu0 %760
  %v762 = vsel %vm41, %v742, 0.0
  %763 = vadd.xlane.f32.xlu0 %v762
  %v764 = vpop.xlane.xlu0 %763
  %v765 = vsel %vm41, %v743, 0.0
  %766 = vadd.xlane.f32.xlu0 %v765
  %v767 = vpop.xlane.xlu0 %766
  %v768 = vrcp.pop 32.0
  %v769 = vmul.f32 %v746, %v768
  %v770 = vmul.f32 %v749, %v768
  %v771 = vmul.f32 %v752, %v768
  %v772 = vmul.f32 %v755, %v768
  %v773 = vmul.f32 %v758, %v768
  %v774 = vmul.f32 %v761, %v768
  %v775 = vmul.f32 %v764, %v768
  %v776 = vmul.f32 %v767, %v768
  %v777 = vsub.f32 %v736, %v769
  %v778 = vsub.f32 %v737, %v770
  %v779 = vsub.f32 %v738, %v771
  %v780 = vsub.f32 %v739, %v772
  %v781 = vsub.f32 %v740, %v773
  %v782 = vsub.f32 %v741, %v774
  %v783 = vsub.f32 %v742, %v775
  %v784 = vsub.f32 %v743, %v776
  %v785 = vmul.f32 %v777, %v777
  %v786 = vmul.f32 %v778, %v778
  %v787 = vmul.f32 %v779, %v779
  %v788 = vmul.f32 %v780, %v780
  %v789 = vmul.f32 %v781, %v781
  %v790 = vmul.f32 %v782, %v782
  %v791 = vmul.f32 %v783, %v783
  %v792 = vmul.f32 %v784, %v784
  %v793 = vsel %vm41, %v785, 0.0
  %794 = vadd.xlane.f32.xlu0 %v793
  %v795 = vpop.xlane.xlu0 %794
  %v796 = vsel %vm41, %v786, 0.0
  %797 = vadd.xlane.f32.xlu0 %v796
  %v798 = vpop.xlane.xlu0 %797
  %v799 = vsel %vm41, %v787, 0.0
  %800 = vadd.xlane.f32.xlu0 %v799
  %v801 = vpop.xlane.xlu0 %800
  %v802 = vsel %vm41, %v788, 0.0
  %803 = vadd.xlane.f32.xlu0 %v802
  %v804 = vpop.xlane.xlu0 %803
  %v805 = vsel %vm41, %v789, 0.0
  %806 = vadd.xlane.f32.xlu0 %v805
  %v807 = vpop.xlane.xlu0 %806
  %v808 = vsel %vm41, %v790, 0.0
  %809 = vadd.xlane.f32.xlu0 %v808
  %v810 = vpop.xlane.xlu0 %809
  %v811 = vsel %vm41, %v791, 0.0
  %812 = vadd.xlane.f32.xlu0 %v811
  %v813 = vpop.xlane.xlu0 %812
  %v814 = vsel %vm41, %v792, 0.0
  %815 = vadd.xlane.f32.xlu0 %v814
  %v816 = vpop.xlane.xlu0 %815
  %v817 = vmul.f32 %v795, %v768
  %v818 = vmul.f32 %v798, %v768
  %v819 = vmul.f32 %v801, %v768
  %v820 = vmul.f32 %v804, %v768
  %v821 = vmul.f32 %v807, %v768
  %v822 = vmul.f32 %v810, %v768
  %v823 = vmul.f32 %v813, %v768
  %v824 = vmul.f32 %v816, %v768
  %v825 = vadd.f32 %v817, 1e-05
  %v826 = vadd.f32 %v818, 1e-05
  %v827 = vadd.f32 %v819, 1e-05
  %v828 = vadd.f32 %v820, 1e-05
  %v829 = vadd.f32 %v821, 1e-05
  %v830 = vadd.f32 %v822, 1e-05
  %v831 = vadd.f32 %v823, 1e-05
  %v832 = vadd.f32 %v824, 1e-05
  %v833 = vrsqrt.pop %v825
  %v834 = vrsqrt.pop %v826
  %v835 = vrsqrt.pop %v827
  %v836 = vrsqrt.pop %v828
  %v837 = vrsqrt.pop %v829
  %v838 = vrsqrt.pop %v830
  %v839 = vrsqrt.pop %v831
  %v840 = vrsqrt.pop %v832
  %v841 = vmul.f32 %v777, %v833
  %v842 = vmul.f32 %v778, %v834
  %v843 = vmul.f32 %v779, %v835
  %v844 = vmul.f32 %v780, %v836
  %v845 = vmul.f32 %v781, %v837
  %v846 = vmul.f32 %v782, %v838
  %v847 = vmul.f32 %v783, %v839
  %v848 = vmul.f32 %v784, %v840
  %v849 = vlaneseq
  %v850 = vshrl.u32 %v849, 7
  %v851 = vsub.s32 2, %v850
  %v852 = vrot.slane %v598, %v851
  %v853 = vmul.f32 %v841, %v852
  %v854 = vmul.f32 %v842, %v852
  %v855 = vmul.f32 %v843, %v852
  %v856 = vmul.f32 %v844, %v852
  %v857 = vmul.f32 %v845, %v852
  %v858 = vmul.f32 %v846, %v852
  %v859 = vmul.f32 %v847, %v852
  %v860 = vmul.f32 %v848, %v852
  %v861 = vlaneseq
  %v862 = vshrl.u32 %v861, 7
  %v863 = vsub.s32 3, %v862
  %v864 = vrot.slane %v598, %v863
  %v865 = vadd.f32 %v853, %v864
  %v866 = vadd.f32 %v854, %v864
  %v867 = vadd.f32 %v855, %v864
  %v868 = vadd.f32 %v856, %v864
  %v869 = vadd.f32 %v857, %v864
  %v870 = vadd.f32 %v858, %v864
  %v871 = vadd.f32 %v859, %v864
  %v872 = vadd.f32 %v860, %v864
  %v873 = vld [vmem:[%s4] sm:$0xff]
  %v874 = vld [vmem:[%s4 + $0x8] sm:$0xff]
  %v875 = vld [vmem:[%s4 + $0x10] sm:$0xff]
  %v876 = vld [vmem:[%s4 + $0x18] sm:$0xff]
  %v877 = vld [vmem:[%s5] sm:$0x1]
  %v879 = vlaneseq
  %v880 = vshrl.u32 %v879, 7
  %v881 = vsub.s32 0, %v880
  %v882 = vrot.slane %v877, %v881
  %v885 = vsel %vm41, %v865, 0
  %v888 = vsel %vm41, %v866, 0
  %v891 = vsel %vm41, %v867, 0
  %v894 = vsel %vm41, %v868, 0
  %v897 = vsel %vm41, %v869, 0
  %v900 = vsel %vm41, %v870, 0
  %v903 = vsel %vm41, %v871, 0
  %v906 = vsel %vm41, %v872, 0
  %908 = vmatprep.subr.mxu0 0.0
  %909 = vmatpush1.msra.mxu0 %v873
  %910 = vmatprep.subr.mxu0 0.0
  %911 = vmatpush1.msra.mxu0 %v874
  %912 = vmatprep.subr.mxu0 0.0
  %913 = vmatpush1.msra.mxu0 %v875
  %914 = vmatprep.subr.mxu0 0.0
  %915 = vmatpush1.msra.mxu0 %v876
  %916 = vmatprep.subr.mxu0 0.0
  %917 = vmatpush1.msra.mxu0 0.0
  %918 = vmatprep.subr.mxu0 0.0
  %919 = vmatpush1.msra.mxu0 0.0
  %920 = vmatprep.subr.mxu0 0.0
  %921 = vmatpush1.msra.mxu0 0.0
  %922 = vmatprep.subr.mxu0 0.0
  %923 = vmatpush1.msra.mxu0 0.0
  %924 = vmatprep.subr.mxu0 0.0
  %925 = vmatpush1.msra.mxu0 0.0
  %926 = vmatprep.subr.mxu0 0.0
  %927 = vmatpush1.msra.mxu0 0.0
  %928 = vmatprep.subr.mxu0 0.0
  %929 = vmatpush1.msra.mxu0 0.0
  %930 = vmatprep.subr.mxu0 0.0
  %931 = vmatpush1.msra.mxu0 0.0
  %932 = vmatprep.subr.mxu0 0.0
  %933 = vmatpush1.msra.mxu0 0.0
  %934 = vmatprep.subr.mxu0 0.0
  %935 = vmatpush1.msra.mxu0 0.0
  %936 = vmatprep.subr.mxu0 0.0
  %937 = vmatpush1.msra.mxu0 0.0
  %938 = vmatprep.subr.mxu0 0.0
  %939 = vmatpush1.msra.mxu0 0.0
  %940 = vmatprep.subr.mxu0 0.0
  %941 = vmatpush1.msra.mxu0 0.0
  %942 = vmatprep.subr.mxu0 0.0
  %943 = vmatpush1.msra.mxu0 0.0
  %944 = vmatprep.subr.mxu0 0.0
  %945 = vmatpush1.msra.mxu0 0.0
  %946 = vmatprep.subr.mxu0 0.0
  %947 = vmatpush1.msra.mxu0 0.0
  %948 = vmatprep.subr.mxu0 0.0
  %949 = vmatpush1.msra.mxu0 0.0
  %950 = vmatprep.subr.mxu0 0.0
  %951 = vmatpush1.msra.mxu0 0.0
  %952 = vmatprep.subr.mxu0 0.0
  %953 = vmatpush1.msra.mxu0 0.0
  %954 = vmatprep.subr.mxu0 0.0
  %955 = vmatpush1.msra.mxu0 0.0
  %956 = vmatprep.subr.mxu0 0.0
  %957 = vmatpush1.msra.mxu0 0.0
  %958 = vmatprep.subr.mxu0 0.0
  %959 = vmatpush1.msra.mxu0 0.0
  %960 = vmatprep.subr.mxu0 0.0
  %961 = vmatpush1.msra.mxu0 0.0
  %962 = vmatprep.subr.mxu0 0.0
  %963 = vmatpush1.msra.mxu0 0.0
  %964 = vmatprep.subr.mxu0 0.0
  %965 = vmatpush1.msra.mxu0 0.0
  %966 = vmatprep.subr.mxu0 0.0
  %967 = vmatpush1.msra.mxu0 0.0
  %968 = vmatprep.subr.mxu0 0.0
  %969 = vmatpush1.msra.mxu0 0.0
  %970 = vmatprep.subr.mxu0 0.0
  %971 = vmatpush1.msra.mxu0 0.0
  %972 = vmatprep.mubr.f32.mxu0 0.0
  %973 = vmatmul.mubr.f32.gmra.mrb[0].mxu0 %v885
  %v974 = vpop.f32.mrb[0].mxu0
  %v975 = vadd.f32 %v882, %v974
  %v976 = vpop.f32.mrb[0].mxu0
  %977 = vmatprep.mubr.f32.mxu0 0.0
  %978 = vmatmul.mubr.f32.gmra.mrb[0].mxu0 %v888
  %v979 = vpop.f32.mrb[0].mxu0
  %v980 = vadd.f32 %v882, %v979
  %v981 = vpop.f32.mrb[0].mxu0
  %982 = vmatprep.mubr.f32.mxu0 0.0
  %983 = vmatmul.mubr.f32.gmra.mrb[0].mxu0 %v891
  %v984 = vpop.f32.mrb[0].mxu0
  %v985 = vadd.f32 %v882, %v984
  %v986 = vpop.f32.mrb[0].mxu0
  %987 = vmatprep.mubr.f32.mxu0 0.0
  %988 = vmatmul.mubr.f32.gmra.mrb[0].mxu0 %v894
  %v989 = vpop.f32.mrb[0].mxu0
  %v990 = vadd.f32 %v882, %v989
  %v991 = vpop.f32.mrb[0].mxu0
  %992 = vmatprep.mubr.f32.mxu0 0.0
  %993 = vmatmul.mubr.f32.gmra.mrb[0].mxu0 %v897
  %v994 = vpop.f32.mrb[0].mxu0
  %v995 = vadd.f32 %v882, %v994
  %v996 = vpop.f32.mrb[0].mxu0
  %997 = vmatprep.mubr.f32.mxu0 0.0
  %998 = vmatmul.mubr.f32.gmra.mrb[0].mxu0 %v900
  %v999 = vpop.f32.mrb[0].mxu0
  %v1000 = vadd.f32 %v882, %v999
  %v1001 = vpop.f32.mrb[0].mxu0
  %1002 = vmatprep.mubr.f32.mxu0 0.0
  %1003 = vmatmul.mubr.f32.gmra.mrb[0].mxu0 %v903
  %v1004 = vpop.f32.mrb[0].mxu0
  %v1005 = vadd.f32 %v882, %v1004
  %v1006 = vpop.f32.mrb[0].mxu0
  %1007 = vmatprep.mubr.f32.mxu0 0.0
  %1008 = vmatmul.mubr.f32.gmra.mrb[0].mxu0 %v906
  %v1009 = vpop.f32.mrb[0].mxu0
  %v1010 = vadd.f32 %v882, %v1009
  %v1011 = vpop.f32.mrb[0].mxu0
  %1012 = vdwg.mxu0
  %v1013 = vmax.f32 %v975, 0.0
  %v1014 = vmax.f32 %v980, 0.0
  %v1015 = vmax.f32 %v985, 0.0
  %v1016 = vmax.f32 %v990, 0.0
  %v1017 = vmax.f32 %v995, 0.0
  %v1018 = vmax.f32 %v1000, 0.0
  %v1019 = vmax.f32 %v1005, 0.0
  %v1020 = vmax.f32 %v1010, 0.0
  %v1021 = vld [vmem:[%s6] sm:$0xff]
  %v1022 = vld [vmem:[%s6 + $0x8] sm:$0xff]
  %v1023 = vld [vmem:[%s6 + $0x10] sm:$0xff]
  %v1024 = vld [vmem:[%s6 + $0x18] sm:$0xff]
  %v1025 = vld [vmem:[%s6 + $0x20] sm:$0xff]
  %v1026 = vld [vmem:[%s6 + $0x28] sm:$0xff]
  %v1027 = vld [vmem:[%s6 + $0x30] sm:$0xff]
  %v1028 = vld [vmem:[%s6 + $0x38] sm:$0xff]
  %v1029 = vld [vmem:[%s6 + $0x40] sm:$0xff]
  %v1030 = vld [vmem:[%s6 + $0x48] sm:$0xff]
  %v1031 = vld [vmem:[%s6 + $0x50] sm:$0xff]
  %v1032 = vld [vmem:[%s6 + $0x58] sm:$0xff]
  %v1033 = vld [vmem:[%s6 + $0x60] sm:$0xff]
  %v1034 = vld [vmem:[%s6 + $0x68] sm:$0xff]
  %v1035 = vld [vmem:[%s6 + $0x70] sm:$0xff]
  %v1036 = vld [vmem:[%s6 + $0x78] sm:$0xff]
  %v1037 = vlaneseq
  %v1038 = vshrl.u32 %v1037, 7
  %v1039 = vsub.s32 1, %v1038
  %v1040 = vrot.slane %v598, %v1039
  %1041 = vmatprep.subr.mxu0 0.0
  %1042 = vmatpush1.msra.mxu0 %v1021
  %1043 = vmatprep.subr.mxu0 0.0
  %1044 = vmatpush1.msra.mxu0 %v1022
  %1045 = vmatprep.subr.mxu0 0.0
  %1046 = vmatpush1.msra.mxu0 %v1023
  %1047 = vmatprep.subr.mxu0 0.0
  %1048 = vmatpush1.msra.mxu0 %v1024
  %1049 = vmatprep.subr.mxu0 0.0
  %1050 = vmatpush1.msra.mxu0 %v1025
  %1051 = vmatprep.subr.mxu0 0.0
  %1052 = vmatpush1.msra.mxu0 %v1026
  %1053 = vmatprep.subr.mxu0 0.0
  %1054 = vmatpush1.msra.mxu0 %v1027
  %1055 = vmatprep.subr.mxu0 0.0
  %1056 = vmatpush1.msra.mxu0 %v1028
  %1057 = vmatprep.subr.mxu0 0.0
  %1058 = vmatpush1.msra.mxu0 %v1029
  %1059 = vmatprep.subr.mxu0 0.0
  %1060 = vmatpush1.msra.mxu0 %v1030
  %1061 = vmatprep.subr.mxu0 0.0
  %1062 = vmatpush1.msra.mxu0 %v1031
  %1063 = vmatprep.subr.mxu0 0.0
  %1064 = vmatpush1.msra.mxu0 %v1032
  %1065 = vmatprep.subr.mxu0 0.0
  %1066 = vmatpush1.msra.mxu0 %v1033
  %1067 = vmatprep.subr.mxu0 0.0
  %1068 = vmatpush1.msra.mxu0 %v1034
  %1069 = vmatprep.subr.mxu0 0.0
  %1070 = vmatpush1.msra.mxu0 %v1035
  %1071 = vmatprep.subr.mxu0 0.0
  %1072 = vmatpush1.msra.mxu0 %v1036
  %1073 = vmatprep.subr.mxu0 0.0
  %1074 = vmatpush1.msra.mxu0 0.0
  %1075 = vmatprep.subr.mxu0 0.0
  %1076 = vmatpush1.msra.mxu0 0.0
  %1077 = vmatprep.subr.mxu0 0.0
  %1078 = vmatpush1.msra.mxu0 0.0
  %1079 = vmatprep.subr.mxu0 0.0
  %1080 = vmatpush1.msra.mxu0 0.0
  %1081 = vmatprep.subr.mxu0 0.0
  %1082 = vmatpush1.msra.mxu0 0.0
  %1083 = vmatprep.subr.mxu0 0.0
  %1084 = vmatpush1.msra.mxu0 0.0
  %1085 = vmatprep.subr.mxu0 0.0
  %1086 = vmatpush1.msra.mxu0 0.0
  %1087 = vmatprep.subr.mxu0 0.0
  %1088 = vmatpush1.msra.mxu0 0.0
  %1089 = vmatprep.subr.mxu0 0.0
  %1090 = vmatpush1.msra.mxu0 0.0
  %1091 = vmatprep.subr.mxu0 0.0
  %1092 = vmatpush1.msra.mxu0 0.0
  %1093 = vmatprep.subr.mxu0 0.0
  %1094 = vmatpush1.msra.mxu0 0.0
  %1095 = vmatprep.subr.mxu0 0.0
  %1096 = vmatpush1.msra.mxu0 0.0
  %1097 = vmatprep.subr.mxu0 0.0
  %1098 = vmatpush1.msra.mxu0 0.0
  %1099 = vmatprep.subr.mxu0 0.0
  %1100 = vmatpush1.msra.mxu0 0.0
  %1101 = vmatprep.subr.mxu0 0.0
  %1102 = vmatpush1.msra.mxu0 0.0
  %1103 = vmatprep.subr.mxu0 0.0
  %1104 = vmatpush1.msra.mxu0 0.0
  %1105 = vmatprep.mubr.f32.mxu0 0.0
  %1106 = vmatmul.mubr.f32.gmra.mrb[0].mxu0 %v1013
  %v1107 = vpop.f32.mrb[0].mxu0
  %v1108 = vadd.f32 %v1040, %v1107
  %v1109 = vpop.f32.mrb[0].mxu0
  %1110 = vmatprep.mubr.f32.mxu0 0.0
  %1111 = vmatmul.mubr.f32.gmra.mrb[0].mxu0 %v1014
  %v1112 = vpop.f32.mrb[0].mxu0
  %v1113 = vadd.f32 %v1040, %v1112
  %v1114 = vpop.f32.mrb[0].mxu0
  %1115 = vmatprep.mubr.f32.mxu0 0.0
  %1116 = vmatmul.mubr.f32.gmra.mrb[0].mxu0 %v1015
  %v1117 = vpop.f32.mrb[0].mxu0
  %v1118 = vadd.f32 %v1040, %v1117
  %v1119 = vpop.f32.mrb[0].mxu0
  %1120 = vmatprep.mubr.f32.mxu0 0.0
  %1121 = vmatmul.mubr.f32.gmra.mrb[0].mxu0 %v1016
  %v1122 = vpop.f32.mrb[0].mxu0
  %v1123 = vadd.f32 %v1040, %v1122
  %v1124 = vpop.f32.mrb[0].mxu0
  %1125 = vmatprep.mubr.f32.mxu0 0.0
  %1126 = vmatmul.mubr.f32.gmra.mrb[0].mxu0 %v1017
  %v1127 = vpop.f32.mrb[0].mxu0
  %v1128 = vadd.f32 %v1040, %v1127
  %v1129 = vpop.f32.mrb[0].mxu0
  %1130 = vmatprep.mubr.f32.mxu0 0.0
  %1131 = vmatmul.mubr.f32.gmra.mrb[0].mxu0 %v1018
  %v1132 = vpop.f32.mrb[0].mxu0
  %v1133 = vadd.f32 %v1040, %v1132
  %v1134 = vpop.f32.mrb[0].mxu0
  %1135 = vmatprep.mubr.f32.mxu0 0.0
  %1136 = vmatmul.mubr.f32.gmra.mrb[0].mxu0 %v1019
  %v1137 = vpop.f32.mrb[0].mxu0
  %v1138 = vadd.f32 %v1040, %v1137
  %v1139 = vpop.f32.mrb[0].mxu0
  %1140 = vmatprep.mubr.f32.mxu0 0.0
  %1141 = vmatmul.mubr.f32.gmra.mrb[0].mxu0 %v1020
  %v1142 = vpop.f32.mrb[0].mxu0
  %v1143 = vadd.f32 %v1040, %v1142
  %v1144 = vpop.f32.mrb[0].mxu0
  %1145 = vdwg.mxu0
  %v1146 = vadd.f32 %v865, %v1108
  %v1147 = vadd.f32 %v866, %v1113
  %v1148 = vadd.f32 %v867, %v1118
  %v1149 = vadd.f32 %v868, %v1123
  %v1150 = vadd.f32 %v869, %v1128
  %v1151 = vadd.f32 %v870, %v1133
  %v1152 = vadd.f32 %v871, %v1138
  %v1153 = vadd.f32 %v872, %v1143
  %v1154 = vsel %vm41, %v1146, 0.0
  %1155 = vadd.xlane.f32.xlu0 %v1154
  %v1156 = vpop.xlane.xlu0 %1155
  %v1157 = vsel %vm41, %v1147, 0.0
  %1158 = vadd.xlane.f32.xlu0 %v1157
  %v1159 = vpop.xlane.xlu0 %1158
  %v1160 = vsel %vm41, %v1148, 0.0
  %1161 = vadd.xlane.f32.xlu0 %v1160
  %v1162 = vpop.xlane.xlu0 %1161
  %v1163 = vsel %vm41, %v1149, 0.0
  %1164 = vadd.xlane.f32.xlu0 %v1163
  %v1165 = vpop.xlane.xlu0 %1164
  %v1166 = vsel %vm41, %v1150, 0.0
  %1167 = vadd.xlane.f32.xlu0 %v1166
  %v1168 = vpop.xlane.xlu0 %1167
  %v1169 = vsel %vm41, %v1151, 0.0
  %1170 = vadd.xlane.f32.xlu0 %v1169
  %v1171 = vpop.xlane.xlu0 %1170
  %v1172 = vsel %vm41, %v1152, 0.0
  %1173 = vadd.xlane.f32.xlu0 %v1172
  %v1174 = vpop.xlane.xlu0 %1173
  %v1175 = vsel %vm41, %v1153, 0.0
  %1176 = vadd.xlane.f32.xlu0 %v1175
  %v1177 = vpop.xlane.xlu0 %1176
  %v1178 = vmul.f32 %v1156, %v768
  %v1179 = vmul.f32 %v1159, %v768
  %v1180 = vmul.f32 %v1162, %v768
  %v1181 = vmul.f32 %v1165, %v768
  %v1182 = vmul.f32 %v1168, %v768
  %v1183 = vmul.f32 %v1171, %v768
  %v1184 = vmul.f32 %v1174, %v768
  %v1185 = vmul.f32 %v1177, %v768
  %v1186 = vsub.f32 %v1146, %v1178
  %v1187 = vsub.f32 %v1147, %v1179
  %v1188 = vsub.f32 %v1148, %v1180
  %v1189 = vsub.f32 %v1149, %v1181
  %v1190 = vsub.f32 %v1150, %v1182
  %v1191 = vsub.f32 %v1151, %v1183
  %v1192 = vsub.f32 %v1152, %v1184
  %v1193 = vsub.f32 %v1153, %v1185
  %v1194 = vmul.f32 %v1186, %v1186
  %v1195 = vmul.f32 %v1187, %v1187
  %v1196 = vmul.f32 %v1188, %v1188
  %v1197 = vmul.f32 %v1189, %v1189
  %v1198 = vmul.f32 %v1190, %v1190
  %v1199 = vmul.f32 %v1191, %v1191
  %v1200 = vmul.f32 %v1192, %v1192
  %v1201 = vmul.f32 %v1193, %v1193
  %v1202 = vsel %vm41, %v1194, 0.0
  %1203 = vadd.xlane.f32.xlu0 %v1202
  %v1204 = vpop.xlane.xlu0 %1203
  %v1205 = vsel %vm41, %v1195, 0.0
  %1206 = vadd.xlane.f32.xlu0 %v1205
  %v1207 = vpop.xlane.xlu0 %1206
  %v1208 = vsel %vm41, %v1196, 0.0
  %1209 = vadd.xlane.f32.xlu0 %v1208
  %v1210 = vpop.xlane.xlu0 %1209
  %v1211 = vsel %vm41, %v1197, 0.0
  %1212 = vadd.xlane.f32.xlu0 %v1211
  %v1213 = vpop.xlane.xlu0 %1212
  %v1214 = vsel %vm41, %v1198, 0.0
  %1215 = vadd.xlane.f32.xlu0 %v1214
  %v1216 = vpop.xlane.xlu0 %1215
  %v1217 = vsel %vm41, %v1199, 0.0
  %1218 = vadd.xlane.f32.xlu0 %v1217
  %v1219 = vpop.xlane.xlu0 %1218
  %v1220 = vsel %vm41, %v1200, 0.0
  %1221 = vadd.xlane.f32.xlu0 %v1220
  %v1222 = vpop.xlane.xlu0 %1221
  %v1223 = vsel %vm41, %v1201, 0.0
  %1224 = vadd.xlane.f32.xlu0 %v1223
  %v1225 = vpop.xlane.xlu0 %1224
  %v1226 = vmul.f32 %v1204, %v768
  %v1227 = vmul.f32 %v1207, %v768
  %v1228 = vmul.f32 %v1210, %v768
  %v1229 = vmul.f32 %v1213, %v768
  %v1230 = vmul.f32 %v1216, %v768
  %v1231 = vmul.f32 %v1219, %v768
  %v1232 = vmul.f32 %v1222, %v768
  %v1233 = vmul.f32 %v1225, %v768
  %v1234 = vadd.f32 %v1226, 1e-05
  %v1235 = vadd.f32 %v1227, 1e-05
  %v1236 = vadd.f32 %v1228, 1e-05
  %v1237 = vadd.f32 %v1229, 1e-05
  %v1238 = vadd.f32 %v1230, 1e-05
  %v1239 = vadd.f32 %v1231, 1e-05
  %v1240 = vadd.f32 %v1232, 1e-05
  %v1241 = vadd.f32 %v1233, 1e-05
  %v1242 = vrsqrt.pop %v1234
  %v1243 = vrsqrt.pop %v1235
  %v1244 = vrsqrt.pop %v1236
  %v1245 = vrsqrt.pop %v1237
  %v1246 = vrsqrt.pop %v1238
  %v1247 = vrsqrt.pop %v1239
  %v1248 = vrsqrt.pop %v1240
  %v1249 = vrsqrt.pop %v1241
  %v1250 = vmul.f32 %v1186, %v1242
  %v1251 = vmul.f32 %v1187, %v1243
  %v1252 = vmul.f32 %v1188, %v1244
  %v1253 = vmul.f32 %v1189, %v1245
  %v1254 = vmul.f32 %v1190, %v1246
  %v1255 = vmul.f32 %v1191, %v1247
  %v1256 = vmul.f32 %v1192, %v1248
  %v1257 = vmul.f32 %v1193, %v1249
  %v1258 = vlaneseq
  %v1259 = vshrl.u32 %v1258, 7
  %v1260 = vsub.s32 4, %v1259
  %v1261 = vrot.slane %v598, %v1260
  %v1262 = vmul.f32 %v1250, %v1261
  %v1263 = vmul.f32 %v1251, %v1261
  %v1264 = vmul.f32 %v1252, %v1261
  %v1265 = vmul.f32 %v1253, %v1261
  %v1266 = vmul.f32 %v1254, %v1261
  %v1267 = vmul.f32 %v1255, %v1261
  %v1268 = vmul.f32 %v1256, %v1261
  %v1269 = vmul.f32 %v1257, %v1261
  %v1270 = vlaneseq
  %v1271 = vshrl.u32 %v1270, 7
  %v1272 = vsub.s32 5, %v1271
  %v1273 = vrot.slane %v598, %v1272
  %v1274 = vadd.f32 %v1262, %v1273
  %v1275 = vadd.f32 %v1263, %v1273
  %v1276 = vadd.f32 %v1264, %v1273
  %v1277 = vadd.f32 %v1265, %v1273
  %v1278 = vadd.f32 %v1266, %v1273
  %v1279 = vadd.f32 %v1267, %v1273
  %v1280 = vadd.f32 %v1268, %v1273
  %v1281 = vadd.f32 %v1269, %v1273
  %1282 = vst.msk [vmem:[%s8] sm:$0xff] %vm41, %v1274
  %1283 = vst.msk [vmem:[%s8 + $0x8] sm:$0xff] %vm41, %v1275
  %1284 = vst.msk [vmem:[%s8 + $0x10] sm:$0xff] %vm41, %v1276
  %1285 = vst.msk [vmem:[%s8 + $0x18] sm:$0xff] %vm41, %v1277
  %1286 = vst.msk [vmem:[%s8 + $0x20] sm:$0xff] %vm41, %v1278
  %1287 = vst.msk [vmem:[%s8 + $0x28] sm:$0xff] %vm41, %v1279
  %1288 = vst.msk [vmem:[%s8 + $0x30] sm:$0xff] %vm41, %v1280
  %1289 = vst.msk [vmem:[%s8 + $0x38] sm:$0xff] %vm41, %v1281
  // Predicated region
  $region34: #{tpu_custom_call.1} parent=0 // pred_check
    _
  $region35: #{tpu_custom_call.1} parent=0 // pred_check_branch
    %1291 = sbr.rel (0) target = $region37
  $region36: #{tpu_custom_call.1} parent=0 // pred_region
    _
  $region37: #{tpu_custom_call.1} parent=0 // pred_fallthru
    _
  // Predicated region
  $region38: #{tpu_custom_call.1} parent=0 // pred_check
    _
  $region39: #{tpu_custom_call.1} parent=0 // pred_check_branch
    %1293 = sbr.rel (0) target = $region41
  $region40: #{tpu_custom_call.1} parent=0 // pred_region
    _
  $region41: #{tpu_custom_call.1} parent=0 // pred_fallthru
    _

</llo_original>
